<compile_context>
chip_gen: v7x
topology: tpu7x:2x2x1
jax: 0.10.0
libtpu: 0.0.40
codegen_flags: <defaults>
</compile_context>

<pallas_src>
import jax
import jax.numpy as jnp
from jax.experimental import pallas as pl
from jax.experimental.pallas import tpu as pltpu

LRELU_SLOPE = 0.2
LRELU_GAIN = 2.0 ** 0.5          # StyleGAN2 bias_act gain for 'lrelu'
N_MAP_LAYERS = 8                 # StyleGAN2 mapping network depth


def _lrelu(x, slope=LRELU_SLOPE):
    return jnp.where(x >= 0, x, x * slope)


# ----------------------------------------------------------------------------
# Fused kernel: one program, 256-wide lane-packed activations.
#   x (N, nl*zdim) -> block-diag miner MLP -> per-chunk pixel norm (matmul trick)
#   -> 8 block-diag-repeated mapping FC layers (gain pre-folded) -> out (N, nl*zdim)
# ----------------------------------------------------------------------------
def fused_minegan_kernel(z0_ref, w1_ref, b1_ref, w2_ref, b2_ref,
                         nrm_ref, wm_ref, bm_ref, out_ref):
    x = z0_ref[...]                                            # (N, nl*zdim) f32

    # --- miner: per-style-layer 2-layer MLP (block-diagonal weights) ---
    h = jnp.dot(x.astype(jnp.bfloat16), w1_ref[...],
                preferred_element_type=jnp.float32) + b1_ref[...]
    h = _lrelu(h)
    z = jnp.dot(h.astype(jnp.bfloat16), w2_ref[...],
                preferred_element_type=jnp.float32) + b2_ref[...]

    # --- Gmapping: normalize_2nd_moment per (sample, style-layer) chunk ---
    # block-averaging matmul broadcasts each chunk's mean(z^2) to its lanes (f32)
    ms = jnp.dot(z * z, nrm_ref[...], preferred_element_type=jnp.float32)
    x = z * jax.lax.rsqrt(ms + 1e-8)

    # --- Gmapping: 8 x (FC + lrelu); sqrt(2) gain pre-folded into W/b on host ---
    for i in range(wm_ref.shape[0]):                           # static unroll
        x = jnp.dot(x.astype(jnp.bfloat16), wm_ref[i],
                    preferred_element_type=jnp.float32) + bm_ref[i]
        x = _lrelu(x)

    out_ref[...] = x.astype(out_ref.dtype)


# ----------------------------------------------------------------------------
# Host-side parameter packing (done once; mapping net is frozen).
# ----------------------------------------------------------------------------
def _block_diag(blocks):
    """(nl, a, b) -> (nl*a, nl*b) block-diagonal."""
    nl, a, b = blocks.shape
    eye = jnp.eye(nl, dtype=blocks.dtype)
    return jnp.einsum("lab,lm->lamb", blocks, eye).reshape(nl * a, nl * b)


def pack_params(params):
    nl, zdim, hidden = params["miner_w1"].shape
    eye = jnp.eye(nl, dtype=jnp.float32)
    gain = jnp.float32(LRELU_GAIN)

    # miner: independent per style layer -> block-diagonal dense weights (bf16)
    w1p = _block_diag(params["miner_w1"]).astype(jnp.bfloat16)       # (nl*zdim, nl*hidden)
    b1p = params["miner_b1"].reshape(1, nl * hidden)                 # f32
    w2p = _block_diag(params["miner_w2"]).astype(jnp.bfloat16)       # (nl*hidden, nl*zdim)
    b2p = params["miner_b2"].reshape(1, nl * zdim)                   # f32

    # pixel-norm block-averaging matrix (f32): chunk-mean broadcast via matmul
    nrm = jnp.kron(eye, jnp.full((zdim, zdim), 1.0 / zdim, jnp.float32))

    # mapping net: shared 32x32 block repeated on the diagonal; lrelu gain folded
    # in (lrelu(a)*g == lrelu(g*a) for g > 0), so no per-layer scale in-kernel.
    map_w = params["map_w"] * gain                                   # (8, zdim, zdim)
    map_b = params["map_b"] * gain                                   # (8, 1, zdim)
    wmp = jnp.stack([jnp.kron(eye, map_w[i]) for i in range(map_w.shape[0])]
                    ).astype(jnp.bfloat16)                           # (8, nl*zdim, nl*zdim)
    bmp = jnp.tile(map_b, (1, 1, nl))                                # (8, 1, nl*zdim) f32

    return {"w1": w1p, "b1": b1p, "w2": w2p, "b2": b2p,
            "norm": nrm, "map_w": wmp, "map_b": bmp}


# ----------------------------------------------------------------------------
# Wrapper: single pallas_call, whole-array VMEM blocks, lane-dense output.
# ----------------------------------------------------------------------------
def independent_layered_minegan_forward(z0s, packed):
    nl, N, zdim = z0s.shape
    # torch stacks miner output along dim 1 -> (N, nl, zdim); pre-pack the input
    # the same way so lane chunk l of row n == (sample n, style layer l).
    z0_packed = jnp.transpose(z0s, (1, 0, 2)).reshape(N, nl * zdim)

    vmem = pl.BlockSpec(memory_space=pltpu.MemorySpace.VMEM)
    out_packed = pl.pallas_call(
        fused_minegan_kernel,
        out_shape=jax.ShapeDtypeStruct((N, nl * zdim), jnp.float32),
        in_specs=[vmem] * 8,
        out_specs=vmem,
    )(z0_packed, packed["w1"], packed["b1"], packed["w2"], packed["b2"],
      packed["norm"], packed["map_w"], packed["map_b"])

    # lane chunk l of row n is w for (sample n, layer l); row-major reshape
    # reproduces the torch (N, nl, zdim) output. w[:, 0] slot selection is the
    # identity on the single broadcast w copy computed here.
    # TODO(synk): StyleGAN2 truncation (truncation_psi / w_avg lerp) is not
    # reproduced; this path calls Gmapping with truncation disabled.
    return out_packed.reshape(N, nl, zdim)


# ----------------------------------------------------------------------------
# Pure-JAX reference (numerics check, original unpacked params, f32)
# ----------------------------------------------------------------------------
def reference_forward(z0s, params):
    nl, N, zdim = z0s.shape
    h = jnp.einsum("lnd,ldh->lnh", z0s, params["miner_w1"]) + params["miner_b1"]
    h = _lrelu(h)
    z = jnp.einsum("lnh,lhd->lnd", h, params["miner_w2"]) + params["miner_b2"]
    x = jnp.transpose(z, (1, 0, 2)).reshape(N * nl, zdim)
    x = x * jax.lax.rsqrt(jnp.mean(x * x, axis=-1, keepdims=True) + 1e-8)
    for i in range(N_MAP_LAYERS):
        x = x @ params["map_w"][i] + params["map_b"][i]
        x = _lrelu(x) * LRELU_GAIN
    return x.reshape(N, nl, zdim)


# ----------------------------------------------------------------------------
# Deterministic synthetic parameter init (shapes implied by the module)
# ----------------------------------------------------------------------------
def init_params(key, nl, zdim, hidden):
    ks = jax.random.split(key, 6)
    return {
        # per-layer miner MLPs: Linear(zdim -> hidden), lrelu, Linear(hidden -> zdim)
        "miner_w1": jax.random.normal(ks[0], (nl, zdim, hidden), jnp.float32)
                    / jnp.sqrt(zdim).astype(jnp.float32),
        "miner_b1": 0.01 * jax.random.normal(ks[1], (nl, 1, hidden), jnp.float32),
        "miner_w2": jax.random.normal(ks[2], (nl, hidden, zdim), jnp.float32)
                    / jnp.sqrt(hidden).astype(jnp.float32),
        "miner_b2": 0.01 * jax.random.normal(ks[3], (nl, 1, zdim), jnp.float32),
        # StyleGAN2 mapping net: 8 FC layers, 1/sqrt(fan_in) gain folded in,
        # zero-init biases (lr_mul folded on host as well).
        "map_w": jax.random.normal(ks[4], (N_MAP_LAYERS, zdim, zdim), jnp.float32)
                 / jnp.sqrt(zdim).astype(jnp.float32),
        "map_b": jnp.zeros((N_MAP_LAYERS, 1, zdim), jnp.float32),
    }


if __name__ == "__main__":
    nl, N, zdim, hidden = 8, 4, 32, 32

    key = jax.random.PRNGKey(0)
    k_param, k_in = jax.random.split(key)
    params = init_params(k_param, nl, zdim, hidden)
    packed = pack_params(params)
    z0s = jax.random.normal(k_in, (nl, N, zdim), jnp.float32)

    out = independent_layered_minegan_forward(z0s, packed)
    out = jax.block_until_ready(out)
    assert out.shape == (N, nl, zdim), out.shape

    ref = jax.block_until_ready(reference_forward(z0s, params))
    assert jnp.all(jnp.isfinite(out))
    assert jnp.allclose(out, ref, atol=5e-2, rtol=5e-2)

    print("KERNEL_OK")
</pallas_src>

<mosaic_0001>
module attributes {stable_mosaic.version = 11 : i64} {
  func.func @fused_minegan_kernel(%arg0: memref<4x256xf32, #tpu.memory_space<vmem>>, %arg1: memref<256x256xbf16, #tpu.memory_space<vmem>>, %arg2: memref<1x256xf32, #tpu.memory_space<vmem>>, %arg3: memref<256x256xbf16, #tpu.memory_space<vmem>>, %arg4: memref<1x256xf32, #tpu.memory_space<vmem>>, %arg5: memref<256x256xf32, #tpu.memory_space<vmem>>, %arg6: memref<8x256x256xbf16, #tpu.memory_space<vmem>>, %arg7: memref<8x1x256xf32, #tpu.memory_space<vmem>>, %arg8: memref<4x256xf32, #tpu.memory_space<vmem>>) attributes {dimension_semantics = [], scalar_prefetch = 0 : i64, scratch_operands = 0 : i64, tpu.core_type = #tpu.core_type<tc>} {
    %c0 = arith.constant 0 : index
    %c0_0 = arith.constant 0 : index
    %0 = vector.load %arg0[%c0, %c0_0] : memref<4x256xf32, #tpu.memory_space<vmem>>, vector<4x256xf32>
    %1 = arith.truncf %0 : vector<4x256xf32> to vector<4x256xbf16>
    %c0_1 = arith.constant 0 : index
    %c0_2 = arith.constant 0 : index
    %2 = vector.load %arg1[%c0_1, %c0_2] : memref<256x256xbf16, #tpu.memory_space<vmem>>, vector<256x256xbf16>
    %cst = arith.constant dense<0.000000e+00> : vector<4x256xf32>
    %3 = tpu.matmul %1, %2, %cst {dimension_numbers = #tpu.dot_dimension_numbers<[1], [0], [0], [1], [0, 0, 1, 1], [], []>} : vector<4x256xbf16>, vector<256x256xbf16>, vector<4x256xf32> -> vector<4x256xf32>
    %c0_3 = arith.constant 0 : index
    %c0_4 = arith.constant 0 : index
    %4 = vector.load %arg2[%c0_3, %c0_4] : memref<1x256xf32, #tpu.memory_space<vmem>>, vector<1x256xf32>
    %5 = vector.broadcast %4 : vector<1x256xf32> to vector<4x256xf32>
    %6 = arith.addf %3, %5 : vector<4x256xf32>
    %cst_5 = arith.constant 0.000000e+00 : f32
    %7 = vector.broadcast %cst_5 : f32 to vector<4x256xf32>
    %8 = arith.cmpf oge, %6, %7 : vector<4x256xf32>
    %cst_6 = arith.constant 2.000000e-01 : f32
    %9 = vector.broadcast %cst_6 : f32 to vector<4x256xf32>
    %10 = arith.mulf %6, %9 : vector<4x256xf32>
    %11 = arith.select %8, %6, %10 : vector<4x256xi1>, vector<4x256xf32>
    %12 = arith.truncf %11 : vector<4x256xf32> to vector<4x256xbf16>
    %c0_7 = arith.constant 0 : index
    %c0_8 = arith.constant 0 : index
    %13 = vector.load %arg3[%c0_7, %c0_8] : memref<256x256xbf16, #tpu.memory_space<vmem>>, vector<256x256xbf16>
    %cst_9 = arith.constant dense<0.000000e+00> : vector<4x256xf32>
    %14 = tpu.matmul %12, %13, %cst_9 {dimension_numbers = #tpu.dot_dimension_numbers<[1], [0], [0], [1], [0, 0, 1, 1], [], []>} : vector<4x256xbf16>, vector<256x256xbf16>, vector<4x256xf32> -> vector<4x256xf32>
    %c0_10 = arith.constant 0 : index
    %c0_11 = arith.constant 0 : index
    %15 = vector.load %arg4[%c0_10, %c0_11] : memref<1x256xf32, #tpu.memory_space<vmem>>, vector<1x256xf32>
    %16 = vector.broadcast %15 : vector<1x256xf32> to vector<4x256xf32>
    %17 = arith.addf %14, %16 : vector<4x256xf32>
    %18 = arith.mulf %17, %17 : vector<4x256xf32>
    %c0_12 = arith.constant 0 : index
    %c0_13 = arith.constant 0 : index
    %19 = vector.load %arg5[%c0_12, %c0_13] : memref<256x256xf32, #tpu.memory_space<vmem>>, vector<256x256xf32>
    %cst_14 = arith.constant dense<0.000000e+00> : vector<4x256xf32>
    %20 = tpu.matmul %18, %19, %cst_14 {dimension_numbers = #tpu.dot_dimension_numbers<[1], [0], [0], [1], [0, 0, 1, 1], [], []>} : vector<4x256xf32>, vector<256x256xf32>, vector<4x256xf32> -> vector<4x256xf32>
    %cst_15 = arith.constant 9.99999993E-9 : f32
    %21 = vector.broadcast %cst_15 : f32 to vector<4x256xf32>
    %22 = arith.addf %20, %21 : vector<4x256xf32>
    %23 = math.rsqrt %22 : vector<4x256xf32>
    %24 = arith.mulf %17, %23 : vector<4x256xf32>
    %25 = arith.truncf %24 : vector<4x256xf32> to vector<4x256xbf16>
    %c0_16 = arith.constant 0 : index
    %c0_17 = arith.constant 0 : index
    %c0_18 = arith.constant 0 : index
    %26 = vector.load %arg6[%c0_16, %c0_17, %c0_18] : memref<8x256x256xbf16, #tpu.memory_space<vmem>>, vector<1x256x256xbf16>
    %27 = vector.shape_cast %26 : vector<1x256x256xbf16> to vector<256x256xbf16>
    %cst_19 = arith.constant dense<0.000000e+00> : vector<4x256xf32>
    %28 = tpu.matmul %25, %27, %cst_19 {dimension_numbers = #tpu.dot_dimension_numbers<[1], [0], [0], [1], [0, 0, 1, 1], [], []>} : vector<4x256xbf16>, vector<256x256xbf16>, vector<4x256xf32> -> vector<4x256xf32>
    %c0_20 = arith.constant 0 : index
    %c0_21 = arith.constant 0 : index
    %c0_22 = arith.constant 0 : index
    %29 = vector.load %arg7[%c0_20, %c0_21, %c0_22] : memref<8x1x256xf32, #tpu.memory_space<vmem>>, vector<1x1x256xf32>
    %30 = vector.shape_cast %29 : vector<1x1x256xf32> to vector<1x256xf32>
    %31 = vector.broadcast %30 : vector<1x256xf32> to vector<4x256xf32>
    %32 = arith.addf %28, %31 : vector<4x256xf32>
    %cst_23 = arith.constant 0.000000e+00 : f32
    %33 = vector.broadcast %cst_23 : f32 to vector<4x256xf32>
    %34 = arith.cmpf oge, %32, %33 : vector<4x256xf32>
    %cst_24 = arith.constant 2.000000e-01 : f32
    %35 = vector.broadcast %cst_24 : f32 to vector<4x256xf32>
    %36 = arith.mulf %32, %35 : vector<4x256xf32>
    %37 = arith.select %34, %32, %36 : vector<4x256xi1>, vector<4x256xf32>
    %38 = arith.truncf %37 : vector<4x256xf32> to vector<4x256xbf16>
    %c1 = arith.constant 1 : index
    %c0_25 = arith.constant 0 : index
    %c0_26 = arith.constant 0 : index
    %39 = vector.load %arg6[%c1, %c0_25, %c0_26] : memref<8x256x256xbf16, #tpu.memory_space<vmem>>, vector<1x256x256xbf16>
    %40 = vector.shape_cast %39 : vector<1x256x256xbf16> to vector<256x256xbf16>
    %cst_27 = arith.constant dense<0.000000e+00> : vector<4x256xf32>
    %41 = tpu.matmul %38, %40, %cst_27 {dimension_numbers = #tpu.dot_dimension_numbers<[1], [0], [0], [1], [0, 0, 1, 1], [], []>} : vector<4x256xbf16>, vector<256x256xbf16>, vector<4x256xf32> -> vector<4x256xf32>
    %c1_28 = arith.constant 1 : index
    %c0_29 = arith.constant 0 : index
    %c0_30 = arith.constant 0 : index
    %42 = vector.load %arg7[%c1_28, %c0_29, %c0_30] : memref<8x1x256xf32, #tpu.memory_space<vmem>>, vector<1x1x256xf32>
    %43 = vector.shape_cast %42 : vector<1x1x256xf32> to vector<1x256xf32>
    %44 = vector.broadcast %43 : vector<1x256xf32> to vector<4x256xf32>
    %45 = arith.addf %41, %44 : vector<4x256xf32>
    %cst_31 = arith.constant 0.000000e+00 : f32
    %46 = vector.broadcast %cst_31 : f32 to vector<4x256xf32>
    %47 = arith.cmpf oge, %45, %46 : vector<4x256xf32>
    %cst_32 = arith.constant 2.000000e-01 : f32
    %48 = vector.broadcast %cst_32 : f32 to vector<4x256xf32>
    %49 = arith.mulf %45, %48 : vector<4x256xf32>
    %50 = arith.select %47, %45, %49 : vector<4x256xi1>, vector<4x256xf32>
    %51 = arith.truncf %50 : vector<4x256xf32> to vector<4x256xbf16>
    %c2 = arith.constant 2 : index
    %c0_33 = arith.constant 0 : index
    %c0_34 = arith.constant 0 : index
    %52 = vector.load %arg6[%c2, %c0_33, %c0_34] : memref<8x256x256xbf16, #tpu.memory_space<vmem>>, vector<1x256x256xbf16>
    %53 = vector.shape_cast %52 : vector<1x256x256xbf16> to vector<256x256xbf16>
    %cst_35 = arith.constant dense<0.000000e+00> : vector<4x256xf32>
    %54 = tpu.matmul %51, %53, %cst_35 {dimension_numbers = #tpu.dot_dimension_numbers<[1], [0], [0], [1], [0, 0, 1, 1], [], []>} : vector<4x256xbf16>, vector<256x256xbf16>, vector<4x256xf32> -> vector<4x256xf32>
    %c2_36 = arith.constant 2 : index
    %c0_37 = arith.constant 0 : index
    %c0_38 = arith.constant 0 : index
    %55 = vector.load %arg7[%c2_36, %c0_37, %c0_38] : memref<8x1x256xf32, #tpu.memory_space<vmem>>, vector<1x1x256xf32>
    %56 = vector.shape_cast %55 : vector<1x1x256xf32> to vector<1x256xf32>
    %57 = vector.broadcast %56 : vector<1x256xf32> to vector<4x256xf32>
    %58 = arith.addf %54, %57 : vector<4x256xf32>
    %cst_39 = arith.constant 0.000000e+00 : f32
    %59 = vector.broadcast %cst_39 : f32 to vector<4x256xf32>
    %60 = arith.cmpf oge, %58, %59 : vector<4x256xf32>
    %cst_40 = arith.constant 2.000000e-01 : f32
    %61 = vector.broadcast %cst_40 : f32 to vector<4x256xf32>
    %62 = arith.mulf %58, %61 : vector<4x256xf32>
    %63 = arith.select %60, %58, %62 : vector<4x256xi1>, vector<4x256xf32>
    %64 = arith.truncf %63 : vector<4x256xf32> to vector<4x256xbf16>
    %c3 = arith.constant 3 : index
    %c0_41 = arith.constant 0 : index
    %c0_42 = arith.constant 0 : index
    %65 = vector.load %arg6[%c3, %c0_41, %c0_42] : memref<8x256x256xbf16, #tpu.memory_space<vmem>>, vector<1x256x256xbf16>
    %66 = vector.shape_cast %65 : vector<1x256x256xbf16> to vector<256x256xbf16>
    %cst_43 = arith.constant dense<0.000000e+00> : vector<4x256xf32>
    %67 = tpu.matmul %64, %66, %cst_43 {dimension_numbers = #tpu.dot_dimension_numbers<[1], [0], [0], [1], [0, 0, 1, 1], [], []>} : vector<4x256xbf16>, vector<256x256xbf16>, vector<4x256xf32> -> vector<4x256xf32>
    %c3_44 = arith.constant 3 : index
    %c0_45 = arith.constant 0 : index
    %c0_46 = arith.constant 0 : index
    %68 = vector.load %arg7[%c3_44, %c0_45, %c0_46] : memref<8x1x256xf32, #tpu.memory_space<vmem>>, vector<1x1x256xf32>
    %69 = vector.shape_cast %68 : vector<1x1x256xf32> to vector<1x256xf32>
    %70 = vector.broadcast %69 : vector<1x256xf32> to vector<4x256xf32>
    %71 = arith.addf %67, %70 : vector<4x256xf32>
    %cst_47 = arith.constant 0.000000e+00 : f32
    %72 = vector.broadcast %cst_47 : f32 to vector<4x256xf32>
    %73 = arith.cmpf oge, %71, %72 : vector<4x256xf32>
    %cst_48 = arith.constant 2.000000e-01 : f32
    %74 = vector.broadcast %cst_48 : f32 to vector<4x256xf32>
    %75 = arith.mulf %71, %74 : vector<4x256xf32>
    %76 = arith.select %73, %71, %75 : vector<4x256xi1>, vector<4x256xf32>
    %77 = arith.truncf %76 : vector<4x256xf32> to vector<4x256xbf16>
    %c4 = arith.constant 4 : index
    %c0_49 = arith.constant 0 : index
    %c0_50 = arith.constant 0 : index
    %78 = vector.load %arg6[%c4, %c0_49, %c0_50] : memref<8x256x256xbf16, #tpu.memory_space<vmem>>, vector<1x256x256xbf16>
    %79 = vector.shape_cast %78 : vector<1x256x256xbf16> to vector<256x256xbf16>
    %cst_51 = arith.constant dense<0.000000e+00> : vector<4x256xf32>
    %80 = tpu.matmul %77, %79, %cst_51 {dimension_numbers = #tpu.dot_dimension_numbers<[1], [0], [0], [1], [0, 0, 1, 1], [], []>} : vector<4x256xbf16>, vector<256x256xbf16>, vector<4x256xf32> -> vector<4x256xf32>
    %c4_52 = arith.constant 4 : index
    %c0_53 = arith.constant 0 : index
    %c0_54 = arith.constant 0 : index
    %81 = vector.load %arg7[%c4_52, %c0_53, %c0_54] : memref<8x1x256xf32, #tpu.memory_space<vmem>>, vector<1x1x256xf32>
    %82 = vector.shape_cast %81 : vector<1x1x256xf32> to vector<1x256xf32>
    %83 = vector.broadcast %82 : vector<1x256xf32> to vector<4x256xf32>
    %84 = arith.addf %80, %83 : vector<4x256xf32>
    %cst_55 = arith.constant 0.000000e+00 : f32
    %85 = vector.broadcast %cst_55 : f32 to vector<4x256xf32>
    %86 = arith.cmpf oge, %84, %85 : vector<4x256xf32>
    %cst_56 = arith.constant 2.000000e-01 : f32
    %87 = vector.broadcast %cst_56 : f32 to vector<4x256xf32>
    %88 = arith.mulf %84, %87 : vector<4x256xf32>
    %89 = arith.select %86, %84, %88 : vector<4x256xi1>, vector<4x256xf32>
    %90 = arith.truncf %89 : vector<4x256xf32> to vector<4x256xbf16>
    %c5 = arith.constant 5 : index
    %c0_57 = arith.constant 0 : index
    %c0_58 = arith.constant 0 : index
    %91 = vector.load %arg6[%c5, %c0_57, %c0_58] : memref<8x256x256xbf16, #tpu.memory_space<vmem>>, vector<1x256x256xbf16>
    %92 = vector.shape_cast %91 : vector<1x256x256xbf16> to vector<256x256xbf16>
    %cst_59 = arith.constant dense<0.000000e+00> : vector<4x256xf32>
    %93 = tpu.matmul %90, %92, %cst_59 {dimension_numbers = #tpu.dot_dimension_numbers<[1], [0], [0], [1], [0, 0, 1, 1], [], []>} : vector<4x256xbf16>, vector<256x256xbf16>, vector<4x256xf32> -> vector<4x256xf32>
    %c5_60 = arith.constant 5 : index
    %c0_61 = arith.constant 0 : index
    %c0_62 = arith.constant 0 : index
    %94 = vector.load %arg7[%c5_60, %c0_61, %c0_62] : memref<8x1x256xf32, #tpu.memory_space<vmem>>, vector<1x1x256xf32>
    %95 = vector.shape_cast %94 : vector<1x1x256xf32> to vector<1x256xf32>
    %96 = vector.broadcast %95 : vector<1x256xf32> to vector<4x256xf32>
    %97 = arith.addf %93, %96 : vector<4x256xf32>
    %cst_63 = arith.constant 0.000000e+00 : f32
    %98 = vector.broadcast %cst_63 : f32 to vector<4x256xf32>
    %99 = arith.cmpf oge, %97, %98 : vector<4x256xf32>
    %cst_64 = arith.constant 2.000000e-01 : f32
    %100 = vector.broadcast %cst_64 : f32 to vector<4x256xf32>
    %101 = arith.mulf %97, %100 : vector<4x256xf32>
    %102 = arith.select %99, %97, %101 : vector<4x256xi1>, vector<4x256xf32>
    %103 = arith.truncf %102 : vector<4x256xf32> to vector<4x256xbf16>
    %c6 = arith.constant 6 : index
    %c0_65 = arith.constant 0 : index
    %c0_66 = arith.constant 0 : index
    %104 = vector.load %arg6[%c6, %c0_65, %c0_66] : memref<8x256x256xbf16, #tpu.memory_space<vmem>>, vector<1x256x256xbf16>
    %105 = vector.shape_cast %104 : vector<1x256x256xbf16> to vector<256x256xbf16>
    %cst_67 = arith.constant dense<0.000000e+00> : vector<4x256xf32>
    %106 = tpu.matmul %103, %105, %cst_67 {dimension_numbers = #tpu.dot_dimension_numbers<[1], [0], [0], [1], [0, 0, 1, 1], [], []>} : vector<4x256xbf16>, vector<256x256xbf16>, vector<4x256xf32> -> vector<4x256xf32>
    %c6_68 = arith.constant 6 : index
    %c0_69 = arith.constant 0 : index
    %c0_70 = arith.constant 0 : index
    %107 = vector.load %arg7[%c6_68, %c0_69, %c0_70] : memref<8x1x256xf32, #tpu.memory_space<vmem>>, vector<1x1x256xf32>
    %108 = vector.shape_cast %107 : vector<1x1x256xf32> to vector<1x256xf32>
    %109 = vector.broadcast %108 : vector<1x256xf32> to vector<4x256xf32>
    %110 = arith.addf %106, %109 : vector<4x256xf32>
    %cst_71 = arith.constant 0.000000e+00 : f32
    %111 = vector.broadcast %cst_71 : f32 to vector<4x256xf32>
    %112 = arith.cmpf oge, %110, %111 : vector<4x256xf32>
    %cst_72 = arith.constant 2.000000e-01 : f32
    %113 = vector.broadcast %cst_72 : f32 to vector<4x256xf32>
    %114 = arith.mulf %110, %113 : vector<4x256xf32>
    %115 = arith.select %112, %110, %114 : vector<4x256xi1>, vector<4x256xf32>
    %116 = arith.truncf %115 : vector<4x256xf32> to vector<4x256xbf16>
    %c7 = arith.constant 7 : index
    %c0_73 = arith.constant 0 : index
    %c0_74 = arith.constant 0 : index
    %117 = vector.load %arg6[%c7, %c0_73, %c0_74] : memref<8x256x256xbf16, #tpu.memory_space<vmem>>, vector<1x256x256xbf16>
    %118 = vector.shape_cast %117 : vector<1x256x256xbf16> to vector<256x256xbf16>
    %cst_75 = arith.constant dense<0.000000e+00> : vector<4x256xf32>
    %119 = tpu.matmul %116, %118, %cst_75 {dimension_numbers = #tpu.dot_dimension_numbers<[1], [0], [0], [1], [0, 0, 1, 1], [], []>} : vector<4x256xbf16>, vector<256x256xbf16>, vector<4x256xf32> -> vector<4x256xf32>
    %c7_76 = arith.constant 7 : index
    %c0_77 = arith.constant 0 : index
    %c0_78 = arith.constant 0 : index
    %120 = vector.load %arg7[%c7_76, %c0_77, %c0_78] : memref<8x1x256xf32, #tpu.memory_space<vmem>>, vector<1x1x256xf32>
    %121 = vector.shape_cast %120 : vector<1x1x256xf32> to vector<1x256xf32>
    %122 = vector.broadcast %121 : vector<1x256xf32> to vector<4x256xf32>
    %123 = arith.addf %119, %122 : vector<4x256xf32>
    %cst_79 = arith.constant 0.000000e+00 : f32
    %124 = vector.broadcast %cst_79 : f32 to vector<4x256xf32>
    %125 = arith.cmpf oge, %123, %124 : vector<4x256xf32>
    %cst_80 = arith.constant 2.000000e-01 : f32
    %126 = vector.broadcast %cst_80 : f32 to vector<4x256xf32>
    %127 = arith.mulf %123, %126 : vector<4x256xf32>
    %128 = arith.select %125, %123, %127 : vector<4x256xi1>, vector<4x256xf32>
    %c0_81 = arith.constant 0 : index
    %c0_82 = arith.constant 0 : index
    %129 = vector.load %arg8[%c0_81, %c0_82] : memref<4x256xf32, #tpu.memory_space<vmem>>, vector<4x256xf32>
    tpu.vector_store %arg8[%c0_81, %c0_82], %128 {strides = array<i32>} : memref<4x256xf32, #tpu.memory_space<vmem>>, vector<4x256xf32>,
    return
  }
}

</mosaic_0001>

<llo_original>
// kernel: tpu_custom_call.1
$region0: #{tpu_custom_call.1}
  #allocation0 [shape = 'u32[]', space=smem, size = 0x4, offset = 0x4, fixed_abs, tag = 'smem constant byte address 0x4 - core index']
  #allocation1 [shape = 'u32[144,128]{1,0:T(1,128)}', space=vmem, size = 0x12000, scoped, tag = 'internal scratch']
  %s0 = inlined_call_operand.hbm [shape: f32[4,256], index: 0, kind: input, shape index: {}]
  %s1 = inlined_call_operand.hbm [shape: bf16[256,256], index: 1, kind: input, shape index: {}]
  %s2 = inlined_call_operand.vmem [shape: f32[1,256], index: 2, kind: input, shape index: {}]
  %s3 = inlined_call_operand.hbm [shape: bf16[256,256], index: 3, kind: input, shape index: {}]
  %s4 = inlined_call_operand.vmem [shape: f32[1,256], index: 4, kind: input, shape index: {}]
  %s5 = inlined_call_operand.hbm [shape: f32[256,256], index: 5, kind: input, shape index: {}]
  %s6 = inlined_call_operand.hbm [shape: bf16[8,256,256], index: 6, kind: input, shape index: {}]
  %s7 = inlined_call_operand.vmem [shape: f32[8,1,256], index: 7, kind: input, shape index: {}]
  %s8 = inlined_call_operand.hbm [shape: f32[4,256], index: 8, kind: output, shape index: {}]
  %s9 = sld [smem:[#allocation0]]
  $region62: #{tpu_custom_call.1} parent=0
    _
  %s11 = ssub.s32 1, %s9
  %s12 = scalar_select 0, %s11, %s9
  $region1: #{tpu_custom_call.1} parent=0
    #allocation2 [shape = 'u8[4096]{0}', space=vmem, size = 0x1000, scoped, tag = 'input window, operand 0, single buffered']
    #allocation3 [shape = 's32[1]{0}', space=sflag, size = 0x4, scoped, tag = 'scoped memory for tpu_custom_call.1']
    #allocation4 [shape = 's32[1]{0}', space=sflag, size = 0x4, scoped, tag = 'scoped memory for tpu_custom_call.1']
    #allocation5 [shape = 'u8[131072]{0}', space=vmem, size = 0x20000, scoped, tag = 'input window, operand 1, single buffered']
    #allocation6 [shape = 's32[1]{0}', space=sflag, size = 0x4, scoped, tag = 'scoped memory for tpu_custom_call.1']
    #allocation7 [shape = 'u8[131072]{0}', space=vmem, size = 0x20000, scoped, tag = 'input window, operand 3, single buffered']
    #allocation8 [shape = 'u8[262144]{0}', space=vmem, size = 0x40000, scoped, tag = 'input window, operand 5, single buffered']
    #allocation9 [shape = 's32[1]{0}', space=sflag, size = 0x4, scoped, tag = 'scoped memory for tpu_custom_call.1']
    #allocation10 [shape = 'u8[1048576]{0}', space=vmem, size = 0x100000, scoped, tag = 'input window, operand 6, single buffered']
    #allocation11 [shape = 'u8[4096]{0}', space=vmem, size = 0x1000, scoped, tag = 'output window, operand 0, single buffered']
    %13 = vsyncpa [#allocation3], 0
    %14 = vsyncpa [#allocation6], 0
    %15 = vsyncpa [#allocation9], 0
    %16 = vsyncpa [#allocation4], 0
    // Predicated region
    $region2: #{tpu_custom_call.1} parent=1 // pred_check
      _
    $region3: #{tpu_custom_call.1} parent=1 // pred_check_branch
      %18 = sbr.rel (0) target = $region5
    $region4: #{tpu_custom_call.1} parent=1 // pred_region
      %s20 = ssub.s32 128, 128
      %21 = vsyncadd [#allocation3], %s20
      %s23 = sshll.u32 [#allocation2], 4
      %s24 = int_to_ptr.vmem [resolvable:$true] %s23
      %26 = dma.hbm_to_vmem [thread:$0]  %s0, 128, %s24, [#allocation3]
    $region5: #{tpu_custom_call.1} parent=1 // pred_fallthru
      _
    // Predicated region
    $region6: #{tpu_custom_call.1} parent=1 // pred_check
      _
    $region7: #{tpu_custom_call.1} parent=1 // pred_check_branch
      %28 = sbr.rel (0) target = $region9
    $region8: #{tpu_custom_call.1} parent=1 // pred_region
      %s30 = ssub.s32 4096, 4096
      %31 = vsyncadd [#allocation6], %s30
      %s32 = sshll.u32 [#allocation5], 4
      %s33 = int_to_ptr.vmem [resolvable:$true] %s32
      %38 = dma.hbm_to_vmem [thread:$0]  %s1, 4096, %s33, [#allocation6], 128, 128, 8
    $region9: #{tpu_custom_call.1} parent=1 // pred_fallthru
      _
    // Predicated region
    $region10: #{tpu_custom_call.1} parent=1 // pred_check
      _
    $region11: #{tpu_custom_call.1} parent=1 // pred_check_branch
      %40 = sbr.rel (0) target = $region13
    $region12: #{tpu_custom_call.1} parent=1 // pred_region
      _
    $region13: #{tpu_custom_call.1} parent=1 // pred_fallthru
      _
    // Predicated region
    $region14: #{tpu_custom_call.1} parent=1 // pred_check
      _
    $region15: #{tpu_custom_call.1} parent=1 // pred_check_branch
      %42 = sbr.rel (0) target = $region17
    $region16: #{tpu_custom_call.1} parent=1 // pred_region
      %s44 = ssub.s32 4096, 4096
      %45 = vsyncadd [#allocation6], %s44
      %s46 = sshll.u32 [#allocation7], 4
      %s47 = int_to_ptr.vmem [resolvable:$true] %s46
      %52 = dma.hbm_to_vmem [thread:$0]  %s3, 4096, %s47, [#allocation6], 128, 128, 8
    $region17: #{tpu_custom_call.1} parent=1 // pred_fallthru
      _
    // Predicated region
    $region18: #{tpu_custom_call.1} parent=1 // pred_check
      _
    $region19: #{tpu_custom_call.1} parent=1 // pred_check_branch
      %54 = sbr.rel (0) target = $region21
    $region20: #{tpu_custom_call.1} parent=1 // pred_region
      _
    $region21: #{tpu_custom_call.1} parent=1 // pred_fallthru
      _
    // Predicated region
    $region22: #{tpu_custom_call.1} parent=1 // pred_check
      _
    $region23: #{tpu_custom_call.1} parent=1 // pred_check_branch
      %56 = sbr.rel (0) target = $region25
    $region24: #{tpu_custom_call.1} parent=1 // pred_region
      %s58 = ssub.s32 8192, 8192
      %59 = vsyncadd [#allocation9], %s58
      %s60 = sshll.u32 [#allocation8], 4
      %s61 = int_to_ptr.vmem [resolvable:$true] %s60
      %66 = dma.hbm_to_vmem [thread:$0]  %s5, 8192, %s61, [#allocation9], 256, 256, 16
    $region25: #{tpu_custom_call.1} parent=1 // pred_fallthru
      _
    // Predicated region
    $region26: #{tpu_custom_call.1} parent=1 // pred_check
      _
    $region27: #{tpu_custom_call.1} parent=1 // pred_check_branch
      %68 = sbr.rel (0) target = $region29
    $region28: #{tpu_custom_call.1} parent=1 // pred_region
      %s70 = ssub.s32 32768, 32768
      %71 = vsyncadd [#allocation9], %s70
      %s72 = sshll.u32 [#allocation10], 4
      %s73 = int_to_ptr.vmem [resolvable:$true] %s72
      %78 = dma.hbm_to_vmem [thread:$0]  %s6, 32768, %s73, [#allocation9], 128, 128, 8
    $region29: #{tpu_custom_call.1} parent=1 // pred_fallthru
      _
    // Predicated region
    $region30: #{tpu_custom_call.1} parent=1 // pred_check
      _
    $region31: #{tpu_custom_call.1} parent=1 // pred_check_branch
      %80 = sbr.rel (0) target = $region33
    $region32: #{tpu_custom_call.1} parent=1 // pred_region
      _
    $region33: #{tpu_custom_call.1} parent=1 // pred_fallthru
      _
    // Predicated region
    $region34: #{tpu_custom_call.1} parent=1 // pred_check
      _
    $region35: #{tpu_custom_call.1} parent=1 // pred_check_branch
      %82 = sbr.rel (0) target = $region37
    $region36: #{tpu_custom_call.1} parent=1 // pred_region
      %83 = dma.done [#allocation3], 128
    $region37: #{tpu_custom_call.1} parent=1 // pred_fallthru
      _
    // Predicated region
    $region38: #{tpu_custom_call.1} parent=1 // pred_check
      _
    $region39: #{tpu_custom_call.1} parent=1 // pred_check_branch
      %85 = sbr.rel (0) target = $region41
    $region40: #{tpu_custom_call.1} parent=1 // pred_region
      %86 = dma.done [#allocation6], 4096
    $region41: #{tpu_custom_call.1} parent=1 // pred_fallthru
      _
    // Predicated region
    $region42: #{tpu_custom_call.1} parent=1 // pred_check
      _
    $region43: #{tpu_custom_call.1} parent=1 // pred_check_branch
      %88 = sbr.rel (0) target = $region45
    $region44: #{tpu_custom_call.1} parent=1 // pred_region
      %89 = dma.done [#allocation6], 4096
    $region45: #{tpu_custom_call.1} parent=1 // pred_fallthru
      _
    // Predicated region
    $region46: #{tpu_custom_call.1} parent=1 // pred_check
      _
    $region47: #{tpu_custom_call.1} parent=1 // pred_check_branch
      %91 = sbr.rel (0) target = $region49
    $region48: #{tpu_custom_call.1} parent=1 // pred_region
      %92 = dma.done [#allocation9], 8192
    $region49: #{tpu_custom_call.1} parent=1 // pred_fallthru
      _
    // Predicated region
    $region50: #{tpu_custom_call.1} parent=1 // pred_check
      _
    $region51: #{tpu_custom_call.1} parent=1 // pred_check_branch
      %94 = sbr.rel (0) target = $region53
    $region52: #{tpu_custom_call.1} parent=1 // pred_region
      %95 = dma.done [#allocation9], 32768
    $region53: #{tpu_custom_call.1} parent=1 // pred_fallthru
      _
    %v96 = vld [vmem:[#allocation2] sm:$0xff]
    %v98 = vcombine.high %v96, %v96
    %v100 = vpack.c.bf16 %v96, %v96
    %v101 = vpack.c.bf16 %v98, %v98
    %v102 = vld [vmem:[#allocation5] sm:$0xff]
    %v103 = vld [vmem:[#allocation5 + $0x8] sm:$0xff]
    %v104 = vld [vmem:[#allocation5 + $0x10] sm:$0xff]
    %v105 = vld [vmem:[#allocation5 + $0x18] sm:$0xff]
    %v106 = vld [vmem:[#allocation5 + $0x20] sm:$0xff]
    %v107 = vld [vmem:[#allocation5 + $0x28] sm:$0xff]
    %v108 = vld [vmem:[#allocation5 + $0x30] sm:$0xff]
    %v109 = vld [vmem:[#allocation5 + $0x38] sm:$0xff]
    %v110 = vld [vmem:[#allocation5 + $0x40] sm:$0xff]
    %v111 = vld [vmem:[#allocation5 + $0x48] sm:$0xff]
    %v112 = vld [vmem:[#allocation5 + $0x50] sm:$0xff]
    %v113 = vld [vmem:[#allocation5 + $0x58] sm:$0xff]
    %v114 = vld [vmem:[#allocation5 + $0x60] sm:$0xff]
    %v115 = vld [vmem:[#allocation5 + $0x68] sm:$0xff]
    %v116 = vld [vmem:[#allocation5 + $0x70] sm:$0xff]
    %v117 = vld [vmem:[#allocation5 + $0x78] sm:$0xff]
    %v118 = vld [vmem:[#allocation5 + $0x80] sm:$0xff]
    %v119 = vld [vmem:[#allocation5 + $0x88] sm:$0xff]
    %v120 = vld [vmem:[#allocation5 + $0x90] sm:$0xff]
    %v121 = vld [vmem:[#allocation5 + $0x98] sm:$0xff]
    %v122 = vld [vmem:[#allocation5 + $0xa0] sm:$0xff]
    %v123 = vld [vmem:[#allocation5 + $0xa8] sm:$0xff]
    %v124 = vld [vmem:[#allocation5 + $0xb0] sm:$0xff]
    %v125 = vld [vmem:[#allocation5 + $0xb8] sm:$0xff]
    %v126 = vld [vmem:[#allocation5 + $0xc0] sm:$0xff]
    %v127 = vld [vmem:[#allocation5 + $0xc8] sm:$0xff]
    %v128 = vld [vmem:[#allocation5 + $0xd0] sm:$0xff]
    %v129 = vld [vmem:[#allocation5 + $0xd8] sm:$0xff]
    %v130 = vld [vmem:[#allocation5 + $0xe0] sm:$0xff]
    %v131 = vld [vmem:[#allocation5 + $0xe8] sm:$0xff]
    %v132 = vld [vmem:[#allocation5 + $0xf0] sm:$0xff]
    %v133 = vld [vmem:[#allocation5 + $0xf8] sm:$0xff]
    %v134 = vld [vmem:[%s2] sm:$0x3]
    %v136 = vlaneseq
    %v137 = vshrl.u32 %v136, 7
    %v138 = vsub.s32 0, %v137
    %v139 = vrot.slane %v134, %v138
    %v140 = vlaneseq
    %v141 = vshrl.u32 %v140, 7
    %v142 = vsub.s32 1, %v141
    %v143 = vrot.slane %v134, %v142
    %v178 = vunpack.c.l.b16 %v102
    %v179 = vunpack.c.h.b16 %v102
    %v180 = vunpack.c.l.b16 %v103
    %v181 = vunpack.c.h.b16 %v103
    %v182 = vunpack.c.l.b16 %v104
    %v183 = vunpack.c.h.b16 %v104
    %v184 = vunpack.c.l.b16 %v105
    %v185 = vunpack.c.h.b16 %v105
    %v186 = vunpack.c.l.b16 %v106
    %v187 = vunpack.c.h.b16 %v106
    %v188 = vunpack.c.l.b16 %v107
    %v189 = vunpack.c.h.b16 %v107
    %v190 = vunpack.c.l.b16 %v108
    %v191 = vunpack.c.h.b16 %v108
    %v192 = vunpack.c.l.b16 %v109
    %v193 = vunpack.c.h.b16 %v109
    %v194 = vunpack.c.l.b16 %v110
    %v195 = vunpack.c.h.b16 %v110
    %v196 = vunpack.c.l.b16 %v111
    %v197 = vunpack.c.h.b16 %v111
    %v198 = vunpack.c.l.b16 %v112
    %v199 = vunpack.c.h.b16 %v112
    %v200 = vunpack.c.l.b16 %v113
    %v201 = vunpack.c.h.b16 %v113
    %v202 = vunpack.c.l.b16 %v114
    %v203 = vunpack.c.h.b16 %v114
    %v204 = vunpack.c.l.b16 %v115
    %v205 = vunpack.c.h.b16 %v115
    %v206 = vunpack.c.l.b16 %v116
    %v207 = vunpack.c.h.b16 %v116
    %v208 = vunpack.c.l.b16 %v117
    %v209 = vunpack.c.h.b16 %v117
    %v210 = vunpack.c.l.b16 %v118
    %v211 = vunpack.c.h.b16 %v118
    %v212 = vunpack.c.l.b16 %v119
    %v213 = vunpack.c.h.b16 %v119
    %v214 = vunpack.c.l.b16 %v120
    %v215 = vunpack.c.h.b16 %v120
    %v216 = vunpack.c.l.b16 %v121
    %v217 = vunpack.c.h.b16 %v121
    %v218 = vunpack.c.l.b16 %v122
    %v219 = vunpack.c.h.b16 %v122
    %v220 = vunpack.c.l.b16 %v123
    %v221 = vunpack.c.h.b16 %v123
    %v222 = vunpack.c.l.b16 %v124
    %v223 = vunpack.c.h.b16 %v124
    %v224 = vunpack.c.l.b16 %v125
    %v225 = vunpack.c.h.b16 %v125
    %v226 = vunpack.c.l.b16 %v126
    %v227 = vunpack.c.h.b16 %v126
    %v228 = vunpack.c.l.b16 %v127
    %v229 = vunpack.c.h.b16 %v127
    %v230 = vunpack.c.l.b16 %v128
    %v231 = vunpack.c.h.b16 %v128
    %v232 = vunpack.c.l.b16 %v129
    %v233 = vunpack.c.h.b16 %v129
    %v234 = vunpack.c.l.b16 %v130
    %v235 = vunpack.c.h.b16 %v130
    %v236 = vunpack.c.l.b16 %v131
    %v237 = vunpack.c.h.b16 %v131
    %v238 = vunpack.c.l.b16 %v132
    %v239 = vunpack.c.h.b16 %v132
    %v240 = vunpack.c.l.b16 %v133
    %v241 = vunpack.c.h.b16 %v133
    %v242 = vpack.c.b16 %v180, %v178
    %v243 = vpack.c.b16 %v181, %v179
    %v244 = vpack.c.b16 %v184, %v182
    %v245 = vpack.c.b16 %v185, %v183
    %v246 = vpack.c.b16 %v188, %v186
    %v247 = vpack.c.b16 %v189, %v187
    %v248 = vpack.c.b16 %v192, %v190
    %v249 = vpack.c.b16 %v193, %v191
    %v250 = vpack.c.b16 %v196, %v194
    %v251 = vpack.c.b16 %v197, %v195
    %v252 = vpack.c.b16 %v200, %v198
    %v253 = vpack.c.b16 %v201, %v199
    %v254 = vpack.c.b16 %v204, %v202
    %v255 = vpack.c.b16 %v205, %v203
    %v256 = vpack.c.b16 %v208, %v206
    %v257 = vpack.c.b16 %v209, %v207
    %v258 = vpack.c.b16 %v212, %v210
    %v259 = vpack.c.b16 %v213, %v211
    %v260 = vpack.c.b16 %v216, %v214
    %v261 = vpack.c.b16 %v217, %v215
    %v262 = vpack.c.b16 %v220, %v218
    %v263 = vpack.c.b16 %v221, %v219
    %v264 = vpack.c.b16 %v224, %v222
    %v265 = vpack.c.b16 %v225, %v223
    %v266 = vpack.c.b16 %v228, %v226
    %v267 = vpack.c.b16 %v229, %v227
    %v268 = vpack.c.b16 %v232, %v230
    %v269 = vpack.c.b16 %v233, %v231
    %v270 = vpack.c.b16 %v236, %v234
    %v271 = vpack.c.b16 %v237, %v235
    %v272 = vpack.c.b16 %v240, %v238
    %v273 = vpack.c.b16 %v241, %v239
    %306 = vmatprep.subr.bf16.mxu0 %v243
    %307 = vmatpush1.bf16.msra.mxu0 %v242
    %308 = vmatprep.subr.bf16.mxu0 %v245
    %309 = vmatpush1.bf16.msra.mxu0 %v244
    %310 = vmatprep.subr.bf16.mxu0 %v247
    %311 = vmatpush1.bf16.msra.mxu0 %v246
    %312 = vmatprep.subr.bf16.mxu0 %v249
    %313 = vmatpush1.bf16.msra.mxu0 %v248
    %314 = vmatprep.subr.bf16.mxu0 %v251
    %315 = vmatpush1.bf16.msra.mxu0 %v250
    %316 = vmatprep.subr.bf16.mxu0 %v253
    %317 = vmatpush1.bf16.msra.mxu0 %v252
    %318 = vmatprep.subr.bf16.mxu0 %v255
    %319 = vmatpush1.bf16.msra.mxu0 %v254
    %320 = vmatprep.subr.bf16.mxu0 %v257
    %321 = vmatpush1.bf16.msra.mxu0 %v256
    %322 = vmatprep.subr.bf16.mxu0 %v259
    %323 = vmatpush1.bf16.msra.mxu0 %v258
    %324 = vmatprep.subr.bf16.mxu0 %v261
    %325 = vmatpush1.bf16.msra.mxu0 %v260
    %326 = vmatprep.subr.bf16.mxu0 %v263
    %327 = vmatpush1.bf16.msra.mxu0 %v262
    %328 = vmatprep.subr.bf16.mxu0 %v265
    %329 = vmatpush1.bf16.msra.mxu0 %v264
    %330 = vmatprep.subr.bf16.mxu0 %v267
    %331 = vmatpush1.bf16.msra.mxu0 %v266
    %332 = vmatprep.subr.bf16.mxu0 %v269
    %333 = vmatpush1.bf16.msra.mxu0 %v268
    %334 = vmatprep.subr.bf16.mxu0 %v271
    %335 = vmatpush1.bf16.msra.mxu0 %v270
    %336 = vmatprep.subr.bf16.mxu0 %v273
    %337 = vmatpush1.bf16.msra.mxu0 %v272
    %338 = vmatprep.mubr.bf16.mxu0 %v101
    %339 = vmatmul.mubr.bf16.gmra.mrb[0].mxu0 %v100
    %v340 = vpop.f32.mrb[0].mxu0
    %v341 = vadd.f32 %v139, %v340
    %v342 = vpop.f32.mrb[0].mxu0
    %v343 = vadd.f32 %v143, %v342
    %v344 = vpop.f32.mrb[0].mxu0
    %v345 = vpop.f32.mrb[0].mxu0
    %346 = vdwg.mxu0
    %vm347 = vcmp.ge.f32.partialorder %v341, 0.0
    %vm348 = vcmp.ge.f32.partialorder %v343, 0.0
    %v349 = vmul.f32 %v341, 0.2
    %v350 = vmul.f32 %v343, 0.2
    %v351 = vsel %vm347, %v341, %v349
    %v352 = vsel %vm348, %v343, %v350
    %v353 = vpack.c.bf16 %v351, %v351
    %v354 = vpack.c.bf16 %v352, %v352
    %v355 = vld [vmem:[#allocation7] sm:$0xff]
    %v356 = vld [vmem:[#allocation7 + $0x8] sm:$0xff]
    %v357 = vld [vmem:[#allocation7 + $0x10] sm:$0xff]
    %v358 = vld [vmem:[#allocation7 + $0x18] sm:$0xff]
    %v359 = vld [vmem:[#allocation7 + $0x20] sm:$0xff]
    %v360 = vld [vmem:[#allocation7 + $0x28] sm:$0xff]
    %v361 = vld [vmem:[#allocation7 + $0x30] sm:$0xff]
    %v362 = vld [vmem:[#allocation7 + $0x38] sm:$0xff]
    %v363 = vld [vmem:[#allocation7 + $0x40] sm:$0xff]
    %v364 = vld [vmem:[#allocation7 + $0x48] sm:$0xff]
    %v365 = vld [vmem:[#allocation7 + $0x50] sm:$0xff]
    %v366 = vld [vmem:[#allocation7 + $0x58] sm:$0xff]
    %v367 = vld [vmem:[#allocation7 + $0x60] sm:$0xff]
    %v368 = vld [vmem:[#allocation7 + $0x68] sm:$0xff]
    %v369 = vld [vmem:[#allocation7 + $0x70] sm:$0xff]
    %v370 = vld [vmem:[#allocation7 + $0x78] sm:$0xff]
    %v371 = vld [vmem:[#allocation7 + $0x80] sm:$0xff]
    %v372 = vld [vmem:[#allocation7 + $0x88] sm:$0xff]
    %v373 = vld [vmem:[#allocation7 + $0x90] sm:$0xff]
    %v374 = vld [vmem:[#allocation7 + $0x98] sm:$0xff]
    %v375 = vld [vmem:[#allocation7 + $0xa0] sm:$0xff]
    %v376 = vld [vmem:[#allocation7 + $0xa8] sm:$0xff]
    %v377 = vld [vmem:[#allocation7 + $0xb0] sm:$0xff]
    %v378 = vld [vmem:[#allocation7 + $0xb8] sm:$0xff]
    %v379 = vld [vmem:[#allocation7 + $0xc0] sm:$0xff]
    %v380 = vld [vmem:[#allocation7 + $0xc8] sm:$0xff]
    %v381 = vld [vmem:[#allocation7 + $0xd0] sm:$0xff]
    %v382 = vld [vmem:[#allocation7 + $0xd8] sm:$0xff]
    %v383 = vld [vmem:[#allocation7 + $0xe0] sm:$0xff]
    %v384 = vld [vmem:[#allocation7 + $0xe8] sm:$0xff]
    %v385 = vld [vmem:[#allocation7 + $0xf0] sm:$0xff]
    %v386 = vld [vmem:[#allocation7 + $0xf8] sm:$0xff]
    %v387 = vld [vmem:[%s4] sm:$0x3]
    %v389 = vlaneseq
    %v390 = vshrl.u32 %v389, 7
    %v391 = vsub.s32 0, %v390
    %v392 = vrot.slane %v387, %v391
    %v393 = vlaneseq
    %v394 = vshrl.u32 %v393, 7
    %v395 = vsub.s32 1, %v394
    %v396 = vrot.slane %v387, %v395
    %v431 = vunpack.c.l.b16 %v355
    %v432 = vunpack.c.h.b16 %v355
    %v433 = vunpack.c.l.b16 %v356
    %v434 = vunpack.c.h.b16 %v356
    %v435 = vunpack.c.l.b16 %v357
    %v436 = vunpack.c.h.b16 %v357
    %v437 = vunpack.c.l.b16 %v358
    %v438 = vunpack.c.h.b16 %v358
    %v439 = vunpack.c.l.b16 %v359
    %v440 = vunpack.c.h.b16 %v359
    %v441 = vunpack.c.l.b16 %v360
    %v442 = vunpack.c.h.b16 %v360
    %v443 = vunpack.c.l.b16 %v361
    %v444 = vunpack.c.h.b16 %v361
    %v445 = vunpack.c.l.b16 %v362
    %v446 = vunpack.c.h.b16 %v362
    %v447 = vunpack.c.l.b16 %v363
    %v448 = vunpack.c.h.b16 %v363
    %v449 = vunpack.c.l.b16 %v364
    %v450 = vunpack.c.h.b16 %v364
    %v451 = vunpack.c.l.b16 %v365
    %v452 = vunpack.c.h.b16 %v365
    %v453 = vunpack.c.l.b16 %v366
    %v454 = vunpack.c.h.b16 %v366
    %v455 = vunpack.c.l.b16 %v367
    %v456 = vunpack.c.h.b16 %v367
    %v457 = vunpack.c.l.b16 %v368
    %v458 = vunpack.c.h.b16 %v368
    %v459 = vunpack.c.l.b16 %v369
    %v460 = vunpack.c.h.b16 %v369
    %v461 = vunpack.c.l.b16 %v370
    %v462 = vunpack.c.h.b16 %v370
    %v463 = vunpack.c.l.b16 %v371
    %v464 = vunpack.c.h.b16 %v371
    %v465 = vunpack.c.l.b16 %v372
    %v466 = vunpack.c.h.b16 %v372
    %v467 = vunpack.c.l.b16 %v373
    %v468 = vunpack.c.h.b16 %v373
    %v469 = vunpack.c.l.b16 %v374
    %v470 = vunpack.c.h.b16 %v374
    %v471 = vunpack.c.l.b16 %v375
    %v472 = vunpack.c.h.b16 %v375
    %v473 = vunpack.c.l.b16 %v376
    %v474 = vunpack.c.h.b16 %v376
    %v475 = vunpack.c.l.b16 %v377
    %v476 = vunpack.c.h.b16 %v377
    %v477 = vunpack.c.l.b16 %v378
    %v478 = vunpack.c.h.b16 %v378
    %v479 = vunpack.c.l.b16 %v379
    %v480 = vunpack.c.h.b16 %v379
    %v481 = vunpack.c.l.b16 %v380
    %v482 = vunpack.c.h.b16 %v380
    %v483 = vunpack.c.l.b16 %v381
    %v484 = vunpack.c.h.b16 %v381
    %v485 = vunpack.c.l.b16 %v382
    %v486 = vunpack.c.h.b16 %v382
    %v487 = vunpack.c.l.b16 %v383
    %v488 = vunpack.c.h.b16 %v383
    %v489 = vunpack.c.l.b16 %v384
    %v490 = vunpack.c.h.b16 %v384
    %v491 = vunpack.c.l.b16 %v385
    %v492 = vunpack.c.h.b16 %v385
    %v493 = vunpack.c.l.b16 %v386
    %v494 = vunpack.c.h.b16 %v386
    %v495 = vpack.c.b16 %v433, %v431
    %v496 = vpack.c.b16 %v434, %v432
    %v497 = vpack.c.b16 %v437, %v435
    %v498 = vpack.c.b16 %v438, %v436
    %v499 = vpack.c.b16 %v441, %v439
    %v500 = vpack.c.b16 %v442, %v440
    %v501 = vpack.c.b16 %v445, %v443
    %v502 = vpack.c.b16 %v446, %v444
    %v503 = vpack.c.b16 %v449, %v447
    %v504 = vpack.c.b16 %v450, %v448
    %v505 = vpack.c.b16 %v453, %v451
    %v506 = vpack.c.b16 %v454, %v452
    %v507 = vpack.c.b16 %v457, %v455
    %v508 = vpack.c.b16 %v458, %v456
    %v509 = vpack.c.b16 %v461, %v459
    %v510 = vpack.c.b16 %v462, %v460
    %v511 = vpack.c.b16 %v465, %v463
    %v512 = vpack.c.b16 %v466, %v464
    %v513 = vpack.c.b16 %v469, %v467
    %v514 = vpack.c.b16 %v470, %v468
    %v515 = vpack.c.b16 %v473, %v471
    %v516 = vpack.c.b16 %v474, %v472
    %v517 = vpack.c.b16 %v477, %v475
    %v518 = vpack.c.b16 %v478, %v476
    %v519 = vpack.c.b16 %v481, %v479
    %v520 = vpack.c.b16 %v482, %v480
    %v521 = vpack.c.b16 %v485, %v483
    %v522 = vpack.c.b16 %v486, %v484
    %v523 = vpack.c.b16 %v489, %v487
    %v524 = vpack.c.b16 %v490, %v488
    %v525 = vpack.c.b16 %v493, %v491
    %v526 = vpack.c.b16 %v494, %v492
    %559 = vmatprep.subr.bf16.mxu0 %v496
    %560 = vmatpush1.bf16.msra.mxu0 %v495
    %561 = vmatprep.subr.bf16.mxu0 %v498
    %562 = vmatpush1.bf16.msra.mxu0 %v497
    %563 = vmatprep.subr.bf16.mxu0 %v500
    %564 = vmatpush1.bf16.msra.mxu0 %v499
    %565 = vmatprep.subr.bf16.mxu0 %v502
    %566 = vmatpush1.bf16.msra.mxu0 %v501
    %567 = vmatprep.subr.bf16.mxu0 %v504
    %568 = vmatpush1.bf16.msra.mxu0 %v503
    %569 = vmatprep.subr.bf16.mxu0 %v506
    %570 = vmatpush1.bf16.msra.mxu0 %v505
    %571 = vmatprep.subr.bf16.mxu0 %v508
    %572 = vmatpush1.bf16.msra.mxu0 %v507
    %573 = vmatprep.subr.bf16.mxu0 %v510
    %574 = vmatpush1.bf16.msra.mxu0 %v509
    %575 = vmatprep.subr.bf16.mxu0 %v512
    %576 = vmatpush1.bf16.msra.mxu0 %v511
    %577 = vmatprep.subr.bf16.mxu0 %v514
    %578 = vmatpush1.bf16.msra.mxu0 %v513
    %579 = vmatprep.subr.bf16.mxu0 %v516
    %580 = vmatpush1.bf16.msra.mxu0 %v515
    %581 = vmatprep.subr.bf16.mxu0 %v518
    %582 = vmatpush1.bf16.msra.mxu0 %v517
    %583 = vmatprep.subr.bf16.mxu0 %v520
    %584 = vmatpush1.bf16.msra.mxu0 %v519
    %585 = vmatprep.subr.bf16.mxu0 %v522
    %586 = vmatpush1.bf16.msra.mxu0 %v521
    %587 = vmatprep.subr.bf16.mxu0 %v524
    %588 = vmatpush1.bf16.msra.mxu0 %v523
    %589 = vmatprep.subr.bf16.mxu0 %v526
    %590 = vmatpush1.bf16.msra.mxu0 %v525
    %591 = vmatprep.mubr.bf16.mxu0 %v354
    %592 = vmatmul.mubr.bf16.gmra.mrb[0].mxu0 %v353
    %v593 = vpop.f32.mrb[0].mxu0
    %v594 = vadd.f32 %v392, %v593
    %v595 = vpop.f32.mrb[0].mxu0
    %v596 = vadd.f32 %v396, %v595
    %v597 = vpop.f32.mrb[0].mxu0
    %v598 = vpop.f32.mrb[0].mxu0
    %599 = vdwg.mxu0
    %v600 = vmul.f32 %v594, %v594
    %v601 = vmul.f32 %v596, %v596
    %v602 = vld [vmem:[#allocation8] sm:$0xff]
    %v603 = vld [vmem:[#allocation8 + $0x8] sm:$0xff]
    %v604 = vld [vmem:[#allocation8 + $0x10] sm:$0xff]
    %v605 = vld [vmem:[#allocation8 + $0x18] sm:$0xff]
    %v606 = vld [vmem:[#allocation8 + $0x20] sm:$0xff]
    %v607 = vld [vmem:[#allocation8 + $0x28] sm:$0xff]
    %v608 = vld [vmem:[#allocation8 + $0x30] sm:$0xff]
    %v609 = vld [vmem:[#allocation8 + $0x38] sm:$0xff]
    %v610 = vld [vmem:[#allocation8 + $0x40] sm:$0xff]
    %v611 = vld [vmem:[#allocation8 + $0x48] sm:$0xff]
    %v612 = vld [vmem:[#allocation8 + $0x50] sm:$0xff]
    %v613 = vld [vmem:[#allocation8 + $0x58] sm:$0xff]
    %v614 = vld [vmem:[#allocation8 + $0x60] sm:$0xff]
    %v615 = vld [vmem:[#allocation8 + $0x68] sm:$0xff]
    %v616 = vld [vmem:[#allocation8 + $0x70] sm:$0xff]
    %v617 = vld [vmem:[#allocation8 + $0x78] sm:$0xff]
    %v618 = vld [vmem:[#allocation8 + $0x80] sm:$0xff]
    %v619 = vld [vmem:[#allocation8 + $0x88] sm:$0xff]
    %v620 = vld [vmem:[#allocation8 + $0x90] sm:$0xff]
    %v621 = vld [vmem:[#allocation8 + $0x98] sm:$0xff]
    %v622 = vld [vmem:[#allocation8 + $0xa0] sm:$0xff]
    %v623 = vld [vmem:[#allocation8 + $0xa8] sm:$0xff]
    %v624 = vld [vmem:[#allocation8 + $0xb0] sm:$0xff]
    %v625 = vld [vmem:[#allocation8 + $0xb8] sm:$0xff]
    %v626 = vld [vmem:[#allocation8 + $0xc0] sm:$0xff]
    %v627 = vld [vmem:[#allocation8 + $0xc8] sm:$0xff]
    %v628 = vld [vmem:[#allocation8 + $0xd0] sm:$0xff]
    %v629 = vld [vmem:[#allocation8 + $0xd8] sm:$0xff]
    %v630 = vld [vmem:[#allocation8 + $0xe0] sm:$0xff]
    %v631 = vld [vmem:[#allocation8 + $0xe8] sm:$0xff]
    %v632 = vld [vmem:[#allocation8 + $0xf0] sm:$0xff]
    %v633 = vld [vmem:[#allocation8 + $0xf8] sm:$0xff]
    %v634 = vld [vmem:[#allocation8 + $0x100] sm:$0xff]
    %v635 = vld [vmem:[#allocation8 + $0x108] sm:$0xff]
    %v636 = vld [vmem:[#allocation8 + $0x110] sm:$0xff]
    %v637 = vld [vmem:[#allocation8 + $0x118] sm:$0xff]
    %v638 = vld [vmem:[#allocation8 + $0x120] sm:$0xff]
    %v639 = vld [vmem:[#allocation8 + $0x128] sm:$0xff]
    %v640 = vld [vmem:[#allocation8 + $0x130] sm:$0xff]
    %v641 = vld [vmem:[#allocation8 + $0x138] sm:$0xff]
    %v642 = vld [vmem:[#allocation8 + $0x140] sm:$0xff]
    %v643 = vld [vmem:[#allocation8 + $0x148] sm:$0xff]
    %v644 = vld [vmem:[#allocation8 + $0x150] sm:$0xff]
    %v645 = vld [vmem:[#allocation8 + $0x158] sm:$0xff]
    %v646 = vld [vmem:[#allocation8 + $0x160] sm:$0xff]
    %v647 = vld [vmem:[#allocation8 + $0x168] sm:$0xff]
    %v648 = vld [vmem:[#allocation8 + $0x170] sm:$0xff]
    %v649 = vld [vmem:[#allocation8 + $0x178] sm:$0xff]
    %v650 = vld [vmem:[#allocation8 + $0x180] sm:$0xff]
    %v651 = vld [vmem:[#allocation8 + $0x188] sm:$0xff]
    %v652 = vld [vmem:[#allocation8 + $0x190] sm:$0xff]
    %v653 = vld [vmem:[#allocation8 + $0x198] sm:$0xff]
    %v654 = vld [vmem:[#allocation8 + $0x1a0] sm:$0xff]
    %v655 = vld [vmem:[#allocation8 + $0x1a8] sm:$0xff]
    %v656 = vld [vmem:[#allocation8 + $0x1b0] sm:$0xff]
    %v657 = vld [vmem:[#allocation8 + $0x1b8] sm:$0xff]
    %v658 = vld [vmem:[#allocation8 + $0x1c0] sm:$0xff]
    %v659 = vld [vmem:[#allocation8 + $0x1c8] sm:$0xff]
    %v660 = vld [vmem:[#allocation8 + $0x1d0] sm:$0xff]
    %v661 = vld [vmem:[#allocation8 + $0x1d8] sm:$0xff]
    %v662 = vld [vmem:[#allocation8 + $0x1e0] sm:$0xff]
    %v663 = vld [vmem:[#allocation8 + $0x1e8] sm:$0xff]
    %v664 = vld [vmem:[#allocation8 + $0x1f0] sm:$0xff]
    %v665 = vld [vmem:[#allocation8 + $0x1f8] sm:$0xff]
    %666 = vmatprep.subr.mxu0 %v603
    %667 = vmatpush1.msra.mxu0 %v602
    %668 = vmatprep.subr.mxu0 %v605
    %669 = vmatpush1.msra.mxu0 %v604
    %670 = vmatprep.subr.mxu0 %v607
    %671 = vmatpush1.msra.mxu0 %v606
    %672 = vmatprep.subr.mxu0 %v609
    %673 = vmatpush1.msra.mxu0 %v608
    %674 = vmatprep.subr.mxu0 %v611
    %675 = vmatpush1.msra.mxu0 %v610
    %676 = vmatprep.subr.mxu0 %v613
    %677 = vmatpush1.msra.mxu0 %v612
    %678 = vmatprep.subr.mxu0 %v615
    %679 = vmatpush1.msra.mxu0 %v614
    %680 = vmatprep.subr.mxu0 %v617
    %681 = vmatpush1.msra.mxu0 %v616
    %682 = vmatprep.subr.mxu0 %v619
    %683 = vmatpush1.msra.mxu0 %v618
    %684 = vmatprep.subr.mxu0 %v621
    %685 = vmatpush1.msra.mxu0 %v620
    %686 = vmatprep.subr.mxu0 %v623
    %687 = vmatpush1.msra.mxu0 %v622
    %688 = vmatprep.subr.mxu0 %v625
    %689 = vmatpush1.msra.mxu0 %v624
    %690 = vmatprep.subr.mxu0 %v627
    %691 = vmatpush1.msra.mxu0 %v626
    %692 = vmatprep.subr.mxu0 %v629
    %693 = vmatpush1.msra.mxu0 %v628
    %694 = vmatprep.subr.mxu0 %v631
    %695 = vmatpush1.msra.mxu0 %v630
    %696 = vmatprep.subr.mxu0 %v633
    %697 = vmatpush1.msra.mxu0 %v632
    %698 = vmatprep.subr.mxu0 %v635
    %699 = vmatpush1.msra.mxu0 %v634
    %700 = vmatprep.subr.mxu0 %v637
    %701 = vmatpush1.msra.mxu0 %v636
    %702 = vmatprep.subr.mxu0 %v639
    %703 = vmatpush1.msra.mxu0 %v638
    %704 = vmatprep.subr.mxu0 %v641
    %705 = vmatpush1.msra.mxu0 %v640
    %706 = vmatprep.subr.mxu0 %v643
    %707 = vmatpush1.msra.mxu0 %v642
    %708 = vmatprep.subr.mxu0 %v645
    %709 = vmatpush1.msra.mxu0 %v644
    %710 = vmatprep.subr.mxu0 %v647
    %711 = vmatpush1.msra.mxu0 %v646
    %712 = vmatprep.subr.mxu0 %v649
    %713 = vmatpush1.msra.mxu0 %v648
    %714 = vmatprep.subr.mxu0 %v651
    %715 = vmatpush1.msra.mxu0 %v650
    %716 = vmatprep.subr.mxu0 %v653
    %717 = vmatpush1.msra.mxu0 %v652
    %718 = vmatprep.subr.mxu0 %v655
    %719 = vmatpush1.msra.mxu0 %v654
    %720 = vmatprep.subr.mxu0 %v657
    %721 = vmatpush1.msra.mxu0 %v656
    %722 = vmatprep.subr.mxu0 %v659
    %723 = vmatpush1.msra.mxu0 %v658
    %724 = vmatprep.subr.mxu0 %v661
    %725 = vmatpush1.msra.mxu0 %v660
    %726 = vmatprep.subr.mxu0 %v663
    %727 = vmatpush1.msra.mxu0 %v662
    %728 = vmatprep.subr.mxu0 %v665
    %729 = vmatpush1.msra.mxu0 %v664
    %730 = vmatprep.mubr.f32.mxu0 %v601
    %731 = vmatmul.mubr.f32.gmra.mrb[0].mxu0 %v600
    %v732 = vpop.f32.mrb[0].mxu0
    %v733 = vadd.f32 1e-08, %v732
    %v734 = vpop.f32.mrb[0].mxu0
    %v735 = vadd.f32 1e-08, %v734
    %736 = vdwg.mxu0
    %v737 = vrsqrt.pop %v733
    %v738 = vrsqrt.pop %v735
    %v739 = vmul.f32 %v594, %v737
    %v740 = vmul.f32 %v596, %v738
    %v741 = vpack.c.bf16 %v739, %v739
    %v742 = vpack.c.bf16 %v740, %v740
    %v743 = vld [vmem:[#allocation10] sm:$0xff]
    %v744 = vld [vmem:[#allocation10 + $0x8] sm:$0xff]
    %v745 = vld [vmem:[#allocation10 + $0x10] sm:$0xff]
    %v746 = vld [vmem:[#allocation10 + $0x18] sm:$0xff]
    %v747 = vld [vmem:[#allocation10 + $0x20] sm:$0xff]
    %v748 = vld [vmem:[#allocation10 + $0x28] sm:$0xff]
    %v749 = vld [vmem:[#allocation10 + $0x30] sm:$0xff]
    %v750 = vld [vmem:[#allocation10 + $0x38] sm:$0xff]
    %v751 = vld [vmem:[#allocation10 + $0x40] sm:$0xff]
    %v752 = vld [vmem:[#allocation10 + $0x48] sm:$0xff]
    %v753 = vld [vmem:[#allocation10 + $0x50] sm:$0xff]
    %v754 = vld [vmem:[#allocation10 + $0x58] sm:$0xff]
    %v755 = vld [vmem:[#allocation10 + $0x60] sm:$0xff]
    %v756 = vld [vmem:[#allocation10 + $0x68] sm:$0xff]
    %v757 = vld [vmem:[#allocation10 + $0x70] sm:$0xff]
    %v758 = vld [vmem:[#allocation10 + $0x78] sm:$0xff]
    %v759 = vld [vmem:[#allocation10 + $0x80] sm:$0xff]
    %v760 = vld [vmem:[#allocation10 + $0x88] sm:$0xff]
    %v761 = vld [vmem:[#allocation10 + $0x90] sm:$0xff]
    %v762 = vld [vmem:[#allocation10 + $0x98] sm:$0xff]
    %v763 = vld [vmem:[#allocation10 + $0xa0] sm:$0xff]
    %v764 = vld [vmem:[#allocation10 + $0xa8] sm:$0xff]
    %v765 = vld [vmem:[#allocation10 + $0xb0] sm:$0xff]
    %v766 = vld [vmem:[#allocation10 + $0xb8] sm:$0xff]
    %v767 = vld [vmem:[#allocation10 + $0xc0] sm:$0xff]
    %v768 = vld [vmem:[#allocation10 + $0xc8] sm:$0xff]
    %v769 = vld [vmem:[#allocation10 + $0xd0] sm:$0xff]
    %v770 = vld [vmem:[#allocation10 + $0xd8] sm:$0xff]
    %v771 = vld [vmem:[#allocation10 + $0xe0] sm:$0xff]
    %v772 = vld [vmem:[#allocation10 + $0xe8] sm:$0xff]
    %v773 = vld [vmem:[#allocation10 + $0xf0] sm:$0xff]
    %v774 = vld [vmem:[#allocation10 + $0xf8] sm:$0xff]
    %v775 = vld [vmem:[%s7] sm:$0x3]
    %v777 = vlaneseq
    %v778 = vshrl.u32 %v777, 7
    %v779 = vsub.s32 0, %v778
    %v780 = vrot.slane %v775, %v779
    %v781 = vlaneseq
    %v782 = vshrl.u32 %v781, 7
    %v783 = vsub.s32 1, %v782
    %v784 = vrot.slane %v775, %v783
    %v819 = vunpack.c.l.b16 %v743
    %v820 = vunpack.c.h.b16 %v743
    %v821 = vunpack.c.l.b16 %v744
    %v822 = vunpack.c.h.b16 %v744
    %v823 = vunpack.c.l.b16 %v745
    %v824 = vunpack.c.h.b16 %v745
    %v825 = vunpack.c.l.b16 %v746
    %v826 = vunpack.c.h.b16 %v746
    %v827 = vunpack.c.l.b16 %v747
    %v828 = vunpack.c.h.b16 %v747
    %v829 = vunpack.c.l.b16 %v748
    %v830 = vunpack.c.h.b16 %v748
    %v831 = vunpack.c.l.b16 %v749
    %v832 = vunpack.c.h.b16 %v749
    %v833 = vunpack.c.l.b16 %v750
    %v834 = vunpack.c.h.b16 %v750
    %v835 = vunpack.c.l.b16 %v751
    %v836 = vunpack.c.h.b16 %v751
    %v837 = vunpack.c.l.b16 %v752
    %v838 = vunpack.c.h.b16 %v752
    %v839 = vunpack.c.l.b16 %v753
    %v840 = vunpack.c.h.b16 %v753
    %v841 = vunpack.c.l.b16 %v754
    %v842 = vunpack.c.h.b16 %v754
    %v843 = vunpack.c.l.b16 %v755
    %v844 = vunpack.c.h.b16 %v755
    %v845 = vunpack.c.l.b16 %v756
    %v846 = vunpack.c.h.b16 %v756
    %v847 = vunpack.c.l.b16 %v757
    %v848 = vunpack.c.h.b16 %v757
    %v849 = vunpack.c.l.b16 %v758
    %v850 = vunpack.c.h.b16 %v758
    %v851 = vunpack.c.l.b16 %v759
    %v852 = vunpack.c.h.b16 %v759
    %v853 = vunpack.c.l.b16 %v760
    %v854 = vunpack.c.h.b16 %v760
    %v855 = vunpack.c.l.b16 %v761
    %v856 = vunpack.c.h.b16 %v761
    %v857 = vunpack.c.l.b16 %v762
    %v858 = vunpack.c.h.b16 %v762
    %v859 = vunpack.c.l.b16 %v763
    %v860 = vunpack.c.h.b16 %v763
    %v861 = vunpack.c.l.b16 %v764
    %v862 = vunpack.c.h.b16 %v764
    %v863 = vunpack.c.l.b16 %v765
    %v864 = vunpack.c.h.b16 %v765
    %v865 = vunpack.c.l.b16 %v766
    %v866 = vunpack.c.h.b16 %v766
    %v867 = vunpack.c.l.b16 %v767
    %v868 = vunpack.c.h.b16 %v767
    %v869 = vunpack.c.l.b16 %v768
    %v870 = vunpack.c.h.b16 %v768
    %v871 = vunpack.c.l.b16 %v769
    %v872 = vunpack.c.h.b16 %v769
    %v873 = vunpack.c.l.b16 %v770
    %v874 = vunpack.c.h.b16 %v770
    %v875 = vunpack.c.l.b16 %v771
    %v876 = vunpack.c.h.b16 %v771
    %v877 = vunpack.c.l.b16 %v772
    %v878 = vunpack.c.h.b16 %v772
    %v879 = vunpack.c.l.b16 %v773
    %v880 = vunpack.c.h.b16 %v773
    %v881 = vunpack.c.l.b16 %v774
    %v882 = vunpack.c.h.b16 %v774
    %v883 = vpack.c.b16 %v821, %v819
    %v884 = vpack.c.b16 %v822, %v820
    %v885 = vpack.c.b16 %v825, %v823
    %v886 = vpack.c.b16 %v826, %v824
    %v887 = vpack.c.b16 %v829, %v827
    %v888 = vpack.c.b16 %v830, %v828
    %v889 = vpack.c.b16 %v833, %v831
    %v890 = vpack.c.b16 %v834, %v832
    %v891 = vpack.c.b16 %v837, %v835
    %v892 = vpack.c.b16 %v838, %v836
    %v893 = vpack.c.b16 %v841, %v839
    %v894 = vpack.c.b16 %v842, %v840
    %v895 = vpack.c.b16 %v845, %v843
    %v896 = vpack.c.b16 %v846, %v844
    %v897 = vpack.c.b16 %v849, %v847
    %v898 = vpack.c.b16 %v850, %v848
    %v899 = vpack.c.b16 %v853, %v851
    %v900 = vpack.c.b16 %v854, %v852
    %v901 = vpack.c.b16 %v857, %v855
    %v902 = vpack.c.b16 %v858, %v856
    %v903 = vpack.c.b16 %v861, %v859
    %v904 = vpack.c.b16 %v862, %v860
    %v905 = vpack.c.b16 %v865, %v863
    %v906 = vpack.c.b16 %v866, %v864
    %v907 = vpack.c.b16 %v869, %v867
    %v908 = vpack.c.b16 %v870, %v868
    %v909 = vpack.c.b16 %v873, %v871
    %v910 = vpack.c.b16 %v874, %v872
    %v911 = vpack.c.b16 %v877, %v875
    %v912 = vpack.c.b16 %v878, %v876
    %v913 = vpack.c.b16 %v881, %v879
    %v914 = vpack.c.b16 %v882, %v880
    %947 = vmatprep.subr.bf16.mxu0 %v884
    %948 = vmatpush1.bf16.msra.mxu0 %v883
    %949 = vmatprep.subr.bf16.mxu0 %v886
    %950 = vmatpush1.bf16.msra.mxu0 %v885
    %951 = vmatprep.subr.bf16.mxu0 %v888
    %952 = vmatpush1.bf16.msra.mxu0 %v887
    %953 = vmatprep.subr.bf16.mxu0 %v890
    %954 = vmatpush1.bf16.msra.mxu0 %v889
    %955 = vmatprep.subr.bf16.mxu0 %v892
    %956 = vmatpush1.bf16.msra.mxu0 %v891
    %957 = vmatprep.subr.bf16.mxu0 %v894
    %958 = vmatpush1.bf16.msra.mxu0 %v893
    %959 = vmatprep.subr.bf16.mxu0 %v896
    %960 = vmatpush1.bf16.msra.mxu0 %v895
    %961 = vmatprep.subr.bf16.mxu0 %v898
    %962 = vmatpush1.bf16.msra.mxu0 %v897
    %963 = vmatprep.subr.bf16.mxu0 %v900
    %964 = vmatpush1.bf16.msra.mxu0 %v899
    %965 = vmatprep.subr.bf16.mxu0 %v902
    %966 = vmatpush1.bf16.msra.mxu0 %v901
    %967 = vmatprep.subr.bf16.mxu0 %v904
    %968 = vmatpush1.bf16.msra.mxu0 %v903
    %969 = vmatprep.subr.bf16.mxu0 %v906
    %970 = vmatpush1.bf16.msra.mxu0 %v905
    %971 = vmatprep.subr.bf16.mxu0 %v908
    %972 = vmatpush1.bf16.msra.mxu0 %v907
    %973 = vmatprep.subr.bf16.mxu0 %v910
    %974 = vmatpush1.bf16.msra.mxu0 %v909
    %975 = vmatprep.subr.bf16.mxu0 %v912
    %976 = vmatpush1.bf16.msra.mxu0 %v911
    %977 = vmatprep.subr.bf16.mxu0 %v914
    %978 = vmatpush1.bf16.msra.mxu0 %v913
    %979 = vmatprep.mubr.bf16.mxu0 %v742
    %980 = vmatmul.mubr.bf16.gmra.mrb[0].mxu0 %v741
    %v981 = vpop.f32.mrb[0].mxu0
    %v982 = vadd.f32 %v780, %v981
    %v983 = vpop.f32.mrb[0].mxu0
    %v984 = vadd.f32 %v784, %v983
    %v985 = vpop.f32.mrb[0].mxu0
    %v986 = vpop.f32.mrb[0].mxu0
    %987 = vdwg.mxu0
    %vm988 = vcmp.ge.f32.partialorder %v982, 0.0
    %vm989 = vcmp.ge.f32.partialorder %v984, 0.0
    %v990 = vmul.f32 %v982, 0.2
    %v991 = vmul.f32 %v984, 0.2
    %v992 = vsel %vm988, %v982, %v990
    %v993 = vsel %vm989, %v984, %v991
    %v994 = vpack.c.bf16 %v992, %v992
    %v995 = vpack.c.bf16 %v993, %v993
    %s996 = scalar_lea.vmem [#allocation10], 256
    %v997 = vld [vmem:[%s996] sm:$0xff]
    %v998 = vld [vmem:[%s996 + $0x8] sm:$0xff]
    %v999 = vld [vmem:[%s996 + $0x10] sm:$0xff]
    %v1000 = vld [vmem:[%s996 + $0x18] sm:$0xff]
    %v1001 = vld [vmem:[%s996 + $0x20] sm:$0xff]
    %v1002 = vld [vmem:[%s996 + $0x28] sm:$0xff]
    %v1003 = vld [vmem:[%s996 + $0x30] sm:$0xff]
    %v1004 = vld [vmem:[%s996 + $0x38] sm:$0xff]
    %v1005 = vld [vmem:[%s996 + $0x40] sm:$0xff]
    %v1006 = vld [vmem:[%s996 + $0x48] sm:$0xff]
    %v1007 = vld [vmem:[%s996 + $0x50] sm:$0xff]
    %v1008 = vld [vmem:[%s996 + $0x58] sm:$0xff]
    %v1009 = vld [vmem:[%s996 + $0x60] sm:$0xff]
    %v1010 = vld [vmem:[%s996 + $0x68] sm:$0xff]
    %v1011 = vld [vmem:[%s996 + $0x70] sm:$0xff]
    %v1012 = vld [vmem:[%s996 + $0x78] sm:$0xff]
    %v1013 = vld [vmem:[%s996 + $0x80] sm:$0xff]
    %v1014 = vld [vmem:[%s996 + $0x88] sm:$0xff]
    %v1015 = vld [vmem:[%s996 + $0x90] sm:$0xff]
    %v1016 = vld [vmem:[%s996 + $0x98] sm:$0xff]
    %v1017 = vld [vmem:[%s996 + $0xa0] sm:$0xff]
    %v1018 = vld [vmem:[%s996 + $0xa8] sm:$0xff]
    %v1019 = vld [vmem:[%s996 + $0xb0] sm:$0xff]
    %v1020 = vld [vmem:[%s996 + $0xb8] sm:$0xff]
    %v1021 = vld [vmem:[%s996 + $0xc0] sm:$0xff]
    %v1022 = vld [vmem:[%s996 + $0xc8] sm:$0xff]
    %v1023 = vld [vmem:[%s996 + $0xd0] sm:$0xff]
    %v1024 = vld [vmem:[%s996 + $0xd8] sm:$0xff]
    %v1025 = vld [vmem:[%s996 + $0xe0] sm:$0xff]
    %v1026 = vld [vmem:[%s996 + $0xe8] sm:$0xff]
    %v1027 = vld [vmem:[%s996 + $0xf0] sm:$0xff]
    %v1028 = vld [vmem:[%s996 + $0xf8] sm:$0xff]
    %s1029 = scalar_lea.vmem %s7, 2
    %v1030 = vld [vmem:[%s1029] sm:$0x3]
    %v1032 = vlaneseq
    %v1033 = vshrl.u32 %v1032, 7
    %v1034 = vsub.s32 0, %v1033
    %v1035 = vrot.slane %v1030, %v1034
    %v1036 = vlaneseq
    %v1037 = vshrl.u32 %v1036, 7
    %v1038 = vsub.s32 1, %v1037
    %v1039 = vrot.slane %v1030, %v1038
    %v1074 = vunpack.c.l.b16 %v997
    %v1075 = vunpack.c.h.b16 %v997
    %v1076 = vunpack.c.l.b16 %v998
    %v1077 = vunpack.c.h.b16 %v998
    %v1078 = vunpack.c.l.b16 %v999
    %v1079 = vunpack.c.h.b16 %v999
    %v1080 = vunpack.c.l.b16 %v1000
    %v1081 = vunpack.c.h.b16 %v1000
    %v1082 = vunpack.c.l.b16 %v1001
    %v1083 = vunpack.c.h.b16 %v1001
    %v1084 = vunpack.c.l.b16 %v1002
    %v1085 = vunpack.c.h.b16 %v1002
    %v1086 = vunpack.c.l.b16 %v1003
    %v1087 = vunpack.c.h.b16 %v1003
    %v1088 = vunpack.c.l.b16 %v1004
    %v1089 = vunpack.c.h.b16 %v1004
    %v1090 = vunpack.c.l.b16 %v1005
    %v1091 = vunpack.c.h.b16 %v1005
    %v1092 = vunpack.c.l.b16 %v1006
    %v1093 = vunpack.c.h.b16 %v1006
    %v1094 = vunpack.c.l.b16 %v1007
    %v1095 = vunpack.c.h.b16 %v1007
    %v1096 = vunpack.c.l.b16 %v1008
    %v1097 = vunpack.c.h.b16 %v1008
    %v1098 = vunpack.c.l.b16 %v1009
    %v1099 = vunpack.c.h.b16 %v1009
    %v1100 = vunpack.c.l.b16 %v1010
    %v1101 = vunpack.c.h.b16 %v1010
    %v1102 = vunpack.c.l.b16 %v1011
    %v1103 = vunpack.c.h.b16 %v1011
    %v1104 = vunpack.c.l.b16 %v1012
    %v1105 = vunpack.c.h.b16 %v1012
    %v1106 = vunpack.c.l.b16 %v1013
    %v1107 = vunpack.c.h.b16 %v1013
    %v1108 = vunpack.c.l.b16 %v1014
    %v1109 = vunpack.c.h.b16 %v1014
    %v1110 = vunpack.c.l.b16 %v1015
    %v1111 = vunpack.c.h.b16 %v1015
    %v1112 = vunpack.c.l.b16 %v1016
    %v1113 = vunpack.c.h.b16 %v1016
    %v1114 = vunpack.c.l.b16 %v1017
    %v1115 = vunpack.c.h.b16 %v1017
    %v1116 = vunpack.c.l.b16 %v1018
    %v1117 = vunpack.c.h.b16 %v1018
    %v1118 = vunpack.c.l.b16 %v1019
    %v1119 = vunpack.c.h.b16 %v1019
    %v1120 = vunpack.c.l.b16 %v1020
    %v1121 = vunpack.c.h.b16 %v1020
    %v1122 = vunpack.c.l.b16 %v1021
    %v1123 = vunpack.c.h.b16 %v1021
    %v1124 = vunpack.c.l.b16 %v1022
    %v1125 = vunpack.c.h.b16 %v1022
    %v1126 = vunpack.c.l.b16 %v1023
    %v1127 = vunpack.c.h.b16 %v1023
    %v1128 = vunpack.c.l.b16 %v1024
    %v1129 = vunpack.c.h.b16 %v1024
    %v1130 = vunpack.c.l.b16 %v1025
    %v1131 = vunpack.c.h.b16 %v1025
    %v1132 = vunpack.c.l.b16 %v1026
    %v1133 = vunpack.c.h.b16 %v1026
    %v1134 = vunpack.c.l.b16 %v1027
    %v1135 = vunpack.c.h.b16 %v1027
    %v1136 = vunpack.c.l.b16 %v1028
    %v1137 = vunpack.c.h.b16 %v1028
    %v1138 = vpack.c.b16 %v1076, %v1074
    %v1139 = vpack.c.b16 %v1077, %v1075
    %v1140 = vpack.c.b16 %v1080, %v1078
    %v1141 = vpack.c.b16 %v1081, %v1079
    %v1142 = vpack.c.b16 %v1084, %v1082
    %v1143 = vpack.c.b16 %v1085, %v1083
    %v1144 = vpack.c.b16 %v1088, %v1086
    %v1145 = vpack.c.b16 %v1089, %v1087
    %v1146 = vpack.c.b16 %v1092, %v1090
    %v1147 = vpack.c.b16 %v1093, %v1091
    %v1148 = vpack.c.b16 %v1096, %v1094
    %v1149 = vpack.c.b16 %v1097, %v1095
    %v1150 = vpack.c.b16 %v1100, %v1098
    %v1151 = vpack.c.b16 %v1101, %v1099
    %v1152 = vpack.c.b16 %v1104, %v1102
    %v1153 = vpack.c.b16 %v1105, %v1103
    %v1154 = vpack.c.b16 %v1108, %v1106
    %v1155 = vpack.c.b16 %v1109, %v1107
    %v1156 = vpack.c.b16 %v1112, %v1110
    %v1157 = vpack.c.b16 %v1113, %v1111
    %v1158 = vpack.c.b16 %v1116, %v1114
    %v1159 = vpack.c.b16 %v1117, %v1115
    %v1160 = vpack.c.b16 %v1120, %v1118
    %v1161 = vpack.c.b16 %v1121, %v1119
    %v1162 = vpack.c.b16 %v1124, %v1122
    %v1163 = vpack.c.b16 %v1125, %v1123
    %v1164 = vpack.c.b16 %v1128, %v1126
    %v1165 = vpack.c.b16 %v1129, %v1127
    %v1166 = vpack.c.b16 %v1132, %v1130
    %v1167 = vpack.c.b16 %v1133, %v1131
    %v1168 = vpack.c.b16 %v1136, %v1134
    %v1169 = vpack.c.b16 %v1137, %v1135
    %1202 = vmatprep.subr.bf16.mxu0 %v1139
    %1203 = vmatpush1.bf16.msra.mxu0 %v1138
    %1204 = vmatprep.subr.bf16.mxu0 %v1141
    %1205 = vmatpush1.bf16.msra.mxu0 %v1140
    %1206 = vmatprep.subr.bf16.mxu0 %v1143
    %1207 = vmatpush1.bf16.msra.mxu0 %v1142
    %1208 = vmatprep.subr.bf16.mxu0 %v1145
    %1209 = vmatpush1.bf16.msra.mxu0 %v1144
    %1210 = vmatprep.subr.bf16.mxu0 %v1147
    %1211 = vmatpush1.bf16.msra.mxu0 %v1146
    %1212 = vmatprep.subr.bf16.mxu0 %v1149
    %1213 = vmatpush1.bf16.msra.mxu0 %v1148
    %1214 = vmatprep.subr.bf16.mxu0 %v1151
    %1215 = vmatpush1.bf16.msra.mxu0 %v1150
    %1216 = vmatprep.subr.bf16.mxu0 %v1153
    %1217 = vmatpush1.bf16.msra.mxu0 %v1152
    %1218 = vmatprep.subr.bf16.mxu0 %v1155
    %1219 = vmatpush1.bf16.msra.mxu0 %v1154
    %1220 = vmatprep.subr.bf16.mxu0 %v1157
    %1221 = vmatpush1.bf16.msra.mxu0 %v1156
    %1222 = vmatprep.subr.bf16.mxu0 %v1159
    %1223 = vmatpush1.bf16.msra.mxu0 %v1158
    %1224 = vmatprep.subr.bf16.mxu0 %v1161
    %1225 = vmatpush1.bf16.msra.mxu0 %v1160
    %1226 = vmatprep.subr.bf16.mxu0 %v1163
    %1227 = vmatpush1.bf16.msra.mxu0 %v1162
    %1228 = vmatprep.subr.bf16.mxu0 %v1165
    %1229 = vmatpush1.bf16.msra.mxu0 %v1164
    %1230 = vmatprep.subr.bf16.mxu0 %v1167
    %1231 = vmatpush1.bf16.msra.mxu0 %v1166
    %1232 = vmatprep.subr.bf16.mxu0 %v1169
    %1233 = vmatpush1.bf16.msra.mxu0 %v1168
    %1234 = vmatprep.mubr.bf16.mxu0 %v995
    %1235 = vmatmul.mubr.bf16.gmra.mrb[0].mxu0 %v994
    %v1236 = vpop.f32.mrb[0].mxu0
    %v1237 = vadd.f32 %v1035, %v1236
    %v1238 = vpop.f32.mrb[0].mxu0
    %v1239 = vadd.f32 %v1039, %v1238
    %v1240 = vpop.f32.mrb[0].mxu0
    %v1241 = vpop.f32.mrb[0].mxu0
    %1242 = vdwg.mxu0
    %vm1243 = vcmp.ge.f32.partialorder %v1237, 0.0
    %vm1244 = vcmp.ge.f32.partialorder %v1239, 0.0
    %v1245 = vmul.f32 %v1237, 0.2
    %v1246 = vmul.f32 %v1239, 0.2
    %v1247 = vsel %vm1243, %v1237, %v1245
    %v1248 = vsel %vm1244, %v1239, %v1246
    %v1249 = vpack.c.bf16 %v1247, %v1247
    %v1250 = vpack.c.bf16 %v1248, %v1248
    %s1251 = scalar_lea.vmem [#allocation10], 512
    %v1252 = vld [vmem:[%s1251] sm:$0xff]
    %v1253 = vld [vmem:[%s1251 + $0x8] sm:$0xff]
    %v1254 = vld [vmem:[%s1251 + $0x10] sm:$0xff]
    %v1255 = vld [vmem:[%s1251 + $0x18] sm:$0xff]
    %v1256 = vld [vmem:[%s1251 + $0x20] sm:$0xff]
    %v1257 = vld [vmem:[%s1251 + $0x28] sm:$0xff]
    %v1258 = vld [vmem:[%s1251 + $0x30] sm:$0xff]
    %v1259 = vld [vmem:[%s1251 + $0x38] sm:$0xff]
    %v1260 = vld [vmem:[%s1251 + $0x40] sm:$0xff]
    %v1261 = vld [vmem:[%s1251 + $0x48] sm:$0xff]
    %v1262 = vld [vmem:[%s1251 + $0x50] sm:$0xff]
    %v1263 = vld [vmem:[%s1251 + $0x58] sm:$0xff]
    %v1264 = vld [vmem:[%s1251 + $0x60] sm:$0xff]
    %v1265 = vld [vmem:[%s1251 + $0x68] sm:$0xff]
    %v1266 = vld [vmem:[%s1251 + $0x70] sm:$0xff]
    %v1267 = vld [vmem:[%s1251 + $0x78] sm:$0xff]
    %v1268 = vld [vmem:[%s1251 + $0x80] sm:$0xff]
    %v1269 = vld [vmem:[%s1251 + $0x88] sm:$0xff]
    %v1270 = vld [vmem:[%s1251 + $0x90] sm:$0xff]
    %v1271 = vld [vmem:[%s1251 + $0x98] sm:$0xff]
    %v1272 = vld [vmem:[%s1251 + $0xa0] sm:$0xff]
    %v1273 = vld [vmem:[%s1251 + $0xa8] sm:$0xff]
    %v1274 = vld [vmem:[%s1251 + $0xb0] sm:$0xff]
    %v1275 = vld [vmem:[%s1251 + $0xb8] sm:$0xff]
    %v1276 = vld [vmem:[%s1251 + $0xc0] sm:$0xff]
    %v1277 = vld [vmem:[%s1251 + $0xc8] sm:$0xff]
    %v1278 = vld [vmem:[%s1251 + $0xd0] sm:$0xff]
    %v1279 = vld [vmem:[%s1251 + $0xd8] sm:$0xff]
    %v1280 = vld [vmem:[%s1251 + $0xe0] sm:$0xff]
    %v1281 = vld [vmem:[%s1251 + $0xe8] sm:$0xff]
    %v1282 = vld [vmem:[%s1251 + $0xf0] sm:$0xff]
    %v1283 = vld [vmem:[%s1251 + $0xf8] sm:$0xff]
    %s1284 = scalar_lea.vmem %s7, 4
    %v1285 = vld [vmem:[%s1284] sm:$0x3]
    %v1287 = vlaneseq
    %v1288 = vshrl.u32 %v1287, 7
    %v1289 = vsub.s32 0, %v1288
    %v1290 = vrot.slane %v1285, %v1289
    %v1291 = vlaneseq
    %v1292 = vshrl.u32 %v1291, 7
    %v1293 = vsub.s32 1, %v1292
    %v1294 = vrot.slane %v1285, %v1293
    %v1329 = vunpack.c.l.b16 %v1252
    %v1330 = vunpack.c.h.b16 %v1252
    %v1331 = vunpack.c.l.b16 %v1253
    %v1332 = vunpack.c.h.b16 %v1253
    %v1333 = vunpack.c.l.b16 %v1254
    %v1334 = vunpack.c.h.b16 %v1254
    %v1335 = vunpack.c.l.b16 %v1255
    %v1336 = vunpack.c.h.b16 %v1255
    %v1337 = vunpack.c.l.b16 %v1256
    %v1338 = vunpack.c.h.b16 %v1256
    %v1339 = vunpack.c.l.b16 %v1257
    %v1340 = vunpack.c.h.b16 %v1257
    %v1341 = vunpack.c.l.b16 %v1258
    %v1342 = vunpack.c.h.b16 %v1258
    %v1343 = vunpack.c.l.b16 %v1259
    %v1344 = vunpack.c.h.b16 %v1259
    %v1345 = vunpack.c.l.b16 %v1260
    %v1346 = vunpack.c.h.b16 %v1260
    %v1347 = vunpack.c.l.b16 %v1261
    %v1348 = vunpack.c.h.b16 %v1261
    %v1349 = vunpack.c.l.b16 %v1262
    %v1350 = vunpack.c.h.b16 %v1262
    %v1351 = vunpack.c.l.b16 %v1263
    %v1352 = vunpack.c.h.b16 %v1263
    %v1353 = vunpack.c.l.b16 %v1264
    %v1354 = vunpack.c.h.b16 %v1264
    %v1355 = vunpack.c.l.b16 %v1265
    %v1356 = vunpack.c.h.b16 %v1265
    %v1357 = vunpack.c.l.b16 %v1266
    %v1358 = vunpack.c.h.b16 %v1266
    %v1359 = vunpack.c.l.b16 %v1267
    %v1360 = vunpack.c.h.b16 %v1267
    %v1361 = vunpack.c.l.b16 %v1268
    %v1362 = vunpack.c.h.b16 %v1268
    %v1363 = vunpack.c.l.b16 %v1269
    %v1364 = vunpack.c.h.b16 %v1269
    %v1365 = vunpack.c.l.b16 %v1270
    %v1366 = vunpack.c.h.b16 %v1270
    %v1367 = vunpack.c.l.b16 %v1271
    %v1368 = vunpack.c.h.b16 %v1271
    %v1369 = vunpack.c.l.b16 %v1272
    %v1370 = vunpack.c.h.b16 %v1272
    %v1371 = vunpack.c.l.b16 %v1273
    %v1372 = vunpack.c.h.b16 %v1273
    %v1373 = vunpack.c.l.b16 %v1274
    %v1374 = vunpack.c.h.b16 %v1274
    %v1375 = vunpack.c.l.b16 %v1275
    %v1376 = vunpack.c.h.b16 %v1275
    %v1377 = vunpack.c.l.b16 %v1276
    %v1378 = vunpack.c.h.b16 %v1276
    %v1379 = vunpack.c.l.b16 %v1277
    %v1380 = vunpack.c.h.b16 %v1277
    %v1381 = vunpack.c.l.b16 %v1278
    %v1382 = vunpack.c.h.b16 %v1278
    %v1383 = vunpack.c.l.b16 %v1279
    %v1384 = vunpack.c.h.b16 %v1279
    %v1385 = vunpack.c.l.b16 %v1280
    %v1386 = vunpack.c.h.b16 %v1280
    %v1387 = vunpack.c.l.b16 %v1281
    %v1388 = vunpack.c.h.b16 %v1281
    %v1389 = vunpack.c.l.b16 %v1282
    %v1390 = vunpack.c.h.b16 %v1282
    %v1391 = vunpack.c.l.b16 %v1283
    %v1392 = vunpack.c.h.b16 %v1283
    %v1393 = vpack.c.b16 %v1331, %v1329
    %v1394 = vpack.c.b16 %v1332, %v1330
    %v1395 = vpack.c.b16 %v1335, %v1333
    %v1396 = vpack.c.b16 %v1336, %v1334
    %v1397 = vpack.c.b16 %v1339, %v1337
    %v1398 = vpack.c.b16 %v1340, %v1338
    %v1399 = vpack.c.b16 %v1343, %v1341
    %v1400 = vpack.c.b16 %v1344, %v1342
    %v1401 = vpack.c.b16 %v1347, %v1345
    %v1402 = vpack.c.b16 %v1348, %v1346
    %v1403 = vpack.c.b16 %v1351, %v1349
    %v1404 = vpack.c.b16 %v1352, %v1350
    %v1405 = vpack.c.b16 %v1355, %v1353
    %v1406 = vpack.c.b16 %v1356, %v1354
    %v1407 = vpack.c.b16 %v1359, %v1357
    %v1408 = vpack.c.b16 %v1360, %v1358
    %v1409 = vpack.c.b16 %v1363, %v1361
    %v1410 = vpack.c.b16 %v1364, %v1362
    %v1411 = vpack.c.b16 %v1367, %v1365
    %v1412 = vpack.c.b16 %v1368, %v1366
    %v1413 = vpack.c.b16 %v1371, %v1369
    %v1414 = vpack.c.b16 %v1372, %v1370
    %v1415 = vpack.c.b16 %v1375, %v1373
    %v1416 = vpack.c.b16 %v1376, %v1374
    %v1417 = vpack.c.b16 %v1379, %v1377
    %v1418 = vpack.c.b16 %v1380, %v1378
    %v1419 = vpack.c.b16 %v1383, %v1381
    %v1420 = vpack.c.b16 %v1384, %v1382
    %v1421 = vpack.c.b16 %v1387, %v1385
    %v1422 = vpack.c.b16 %v1388, %v1386
    %v1423 = vpack.c.b16 %v1391, %v1389
    %v1424 = vpack.c.b16 %v1392, %v1390
    %1457 = vmatprep.subr.bf16.mxu0 %v1394
    %1458 = vmatpush1.bf16.msra.mxu0 %v1393
    %1459 = vmatprep.subr.bf16.mxu0 %v1396
    %1460 = vmatpush1.bf16.msra.mxu0 %v1395
    %1461 = vmatprep.subr.bf16.mxu0 %v1398
    %1462 = vmatpush1.bf16.msra.mxu0 %v1397
    %1463 = vmatprep.subr.bf16.mxu0 %v1400
    %1464 = vmatpush1.bf16.msra.mxu0 %v1399
    %1465 = vmatprep.subr.bf16.mxu0 %v1402
    %1466 = vmatpush1.bf16.msra.mxu0 %v1401
    %1467 = vmatprep.subr.bf16.mxu0 %v1404
    %1468 = vmatpush1.bf16.msra.mxu0 %v1403
    %1469 = vmatprep.subr.bf16.mxu0 %v1406
    %1470 = vmatpush1.bf16.msra.mxu0 %v1405
    %1471 = vmatprep.subr.bf16.mxu0 %v1408
    %1472 = vmatpush1.bf16.msra.mxu0 %v1407
    %1473 = vmatprep.subr.bf16.mxu0 %v1410
    %1474 = vmatpush1.bf16.msra.mxu0 %v1409
    %1475 = vmatprep.subr.bf16.mxu0 %v1412
    %1476 = vmatpush1.bf16.msra.mxu0 %v1411
    %1477 = vmatprep.subr.bf16.mxu0 %v1414
    %1478 = vmatpush1.bf16.msra.mxu0 %v1413
    %1479 = vmatprep.subr.bf16.mxu0 %v1416
    %1480 = vmatpush1.bf16.msra.mxu0 %v1415
    %1481 = vmatprep.subr.bf16.mxu0 %v1418
    %1482 = vmatpush1.bf16.msra.mxu0 %v1417
    %1483 = vmatprep.subr.bf16.mxu0 %v1420
    %1484 = vmatpush1.bf16.msra.mxu0 %v1419
    %1485 = vmatprep.subr.bf16.mxu0 %v1422
    %1486 = vmatpush1.bf16.msra.mxu0 %v1421
    %1487 = vmatprep.subr.bf16.mxu0 %v1424
    %1488 = vmatpush1.bf16.msra.mxu0 %v1423
    %1489 = vmatprep.mubr.bf16.mxu0 %v1250
    %1490 = vmatmul.mubr.bf16.gmra.mrb[0].mxu0 %v1249
    %v1491 = vpop.f32.mrb[0].mxu0
    %v1492 = vadd.f32 %v1290, %v1491
    %v1493 = vpop.f32.mrb[0].mxu0
    %v1494 = vadd.f32 %v1294, %v1493
    %v1495 = vpop.f32.mrb[0].mxu0
    %v1496 = vpop.f32.mrb[0].mxu0
    %1497 = vdwg.mxu0
    %vm1498 = vcmp.ge.f32.partialorder %v1492, 0.0
    %vm1499 = vcmp.ge.f32.partialorder %v1494, 0.0
    %v1500 = vmul.f32 %v1492, 0.2
    %v1501 = vmul.f32 %v1494, 0.2
    %v1502 = vsel %vm1498, %v1492, %v1500
    %v1503 = vsel %vm1499, %v1494, %v1501
    %v1504 = vpack.c.bf16 %v1502, %v1502
    %v1505 = vpack.c.bf16 %v1503, %v1503
    %s1506 = scalar_lea.vmem [#allocation10], 768
    %v1507 = vld [vmem:[%s1506] sm:$0xff]
    %v1508 = vld [vmem:[%s1506 + $0x8] sm:$0xff]
    %v1509 = vld [vmem:[%s1506 + $0x10] sm:$0xff]
    %v1510 = vld [vmem:[%s1506 + $0x18] sm:$0xff]
    %v1511 = vld [vmem:[%s1506 + $0x20] sm:$0xff]
    %v1512 = vld [vmem:[%s1506 + $0x28] sm:$0xff]
    %v1513 = vld [vmem:[%s1506 + $0x30] sm:$0xff]
    %v1514 = vld [vmem:[%s1506 + $0x38] sm:$0xff]
    %v1515 = vld [vmem:[%s1506 + $0x40] sm:$0xff]
    %v1516 = vld [vmem:[%s1506 + $0x48] sm:$0xff]
    %v1517 = vld [vmem:[%s1506 + $0x50] sm:$0xff]
    %v1518 = vld [vmem:[%s1506 + $0x58] sm:$0xff]
    %v1519 = vld [vmem:[%s1506 + $0x60] sm:$0xff]
    %v1520 = vld [vmem:[%s1506 + $0x68] sm:$0xff]
    %v1521 = vld [vmem:[%s1506 + $0x70] sm:$0xff]
    %v1522 = vld [vmem:[%s1506 + $0x78] sm:$0xff]
    %v1523 = vld [vmem:[%s1506 + $0x80] sm:$0xff]
    %v1524 = vld [vmem:[%s1506 + $0x88] sm:$0xff]
    %v1525 = vld [vmem:[%s1506 + $0x90] sm:$0xff]
    %v1526 = vld [vmem:[%s1506 + $0x98] sm:$0xff]
    %v1527 = vld [vmem:[%s1506 + $0xa0] sm:$0xff]
    %v1528 = vld [vmem:[%s1506 + $0xa8] sm:$0xff]
    %v1529 = vld [vmem:[%s1506 + $0xb0] sm:$0xff]
    %v1530 = vld [vmem:[%s1506 + $0xb8] sm:$0xff]
    %v1531 = vld [vmem:[%s1506 + $0xc0] sm:$0xff]
    %v1532 = vld [vmem:[%s1506 + $0xc8] sm:$0xff]
    %v1533 = vld [vmem:[%s1506 + $0xd0] sm:$0xff]
    %v1534 = vld [vmem:[%s1506 + $0xd8] sm:$0xff]
    %v1535 = vld [vmem:[%s1506 + $0xe0] sm:$0xff]
    %v1536 = vld [vmem:[%s1506 + $0xe8] sm:$0xff]
    %v1537 = vld [vmem:[%s1506 + $0xf0] sm:$0xff]
    %v1538 = vld [vmem:[%s1506 + $0xf8] sm:$0xff]
    %s1539 = scalar_lea.vmem %s7, 6
    %v1540 = vld [vmem:[%s1539] sm:$0x3]
    %v1542 = vlaneseq
    %v1543 = vshrl.u32 %v1542, 7
    %v1544 = vsub.s32 0, %v1543
    %v1545 = vrot.slane %v1540, %v1544
    %v1546 = vlaneseq
    %v1547 = vshrl.u32 %v1546, 7
    %v1548 = vsub.s32 1, %v1547
    %v1549 = vrot.slane %v1540, %v1548
    %v1584 = vunpack.c.l.b16 %v1507
    %v1585 = vunpack.c.h.b16 %v1507
    %v1586 = vunpack.c.l.b16 %v1508
    %v1587 = vunpack.c.h.b16 %v1508
    %v1588 = vunpack.c.l.b16 %v1509
    %v1589 = vunpack.c.h.b16 %v1509
    %v1590 = vunpack.c.l.b16 %v1510
    %v1591 = vunpack.c.h.b16 %v1510
    %v1592 = vunpack.c.l.b16 %v1511
    %v1593 = vunpack.c.h.b16 %v1511
    %v1594 = vunpack.c.l.b16 %v1512
    %v1595 = vunpack.c.h.b16 %v1512
    %v1596 = vunpack.c.l.b16 %v1513
    %v1597 = vunpack.c.h.b16 %v1513
    %v1598 = vunpack.c.l.b16 %v1514
    %v1599 = vunpack.c.h.b16 %v1514
    %v1600 = vunpack.c.l.b16 %v1515
    %v1601 = vunpack.c.h.b16 %v1515
    %v1602 = vunpack.c.l.b16 %v1516
    %v1603 = vunpack.c.h.b16 %v1516
    %v1604 = vunpack.c.l.b16 %v1517
    %v1605 = vunpack.c.h.b16 %v1517
    %v1606 = vunpack.c.l.b16 %v1518
    %v1607 = vunpack.c.h.b16 %v1518
    %v1608 = vunpack.c.l.b16 %v1519
    %v1609 = vunpack.c.h.b16 %v1519
    %v1610 = vunpack.c.l.b16 %v1520
    %v1611 = vunpack.c.h.b16 %v1520
    %v1612 = vunpack.c.l.b16 %v1521
    %v1613 = vunpack.c.h.b16 %v1521
    %v1614 = vunpack.c.l.b16 %v1522
    %v1615 = vunpack.c.h.b16 %v1522
    %v1616 = vunpack.c.l.b16 %v1523
    %v1617 = vunpack.c.h.b16 %v1523
    %v1618 = vunpack.c.l.b16 %v1524
    %v1619 = vunpack.c.h.b16 %v1524
    %v1620 = vunpack.c.l.b16 %v1525
    %v1621 = vunpack.c.h.b16 %v1525
    %v1622 = vunpack.c.l.b16 %v1526
    %v1623 = vunpack.c.h.b16 %v1526
    %v1624 = vunpack.c.l.b16 %v1527
    %v1625 = vunpack.c.h.b16 %v1527
    %v1626 = vunpack.c.l.b16 %v1528
    %v1627 = vunpack.c.h.b16 %v1528
    %v1628 = vunpack.c.l.b16 %v1529
    %v1629 = vunpack.c.h.b16 %v1529
    %v1630 = vunpack.c.l.b16 %v1530
    %v1631 = vunpack.c.h.b16 %v1530
    %v1632 = vunpack.c.l.b16 %v1531
    %v1633 = vunpack.c.h.b16 %v1531
    %v1634 = vunpack.c.l.b16 %v1532
    %v1635 = vunpack.c.h.b16 %v1532
    %v1636 = vunpack.c.l.b16 %v1533
    %v1637 = vunpack.c.h.b16 %v1533
    %v1638 = vunpack.c.l.b16 %v1534
    %v1639 = vunpack.c.h.b16 %v1534
    %v1640 = vunpack.c.l.b16 %v1535
    %v1641 = vunpack.c.h.b16 %v1535
    %v1642 = vunpack.c.l.b16 %v1536
    %v1643 = vunpack.c.h.b16 %v1536
    %v1644 = vunpack.c.l.b16 %v1537
    %v1645 = vunpack.c.h.b16 %v1537
    %v1646 = vunpack.c.l.b16 %v1538
    %v1647 = vunpack.c.h.b16 %v1538
    %v1648 = vpack.c.b16 %v1586, %v1584
    %v1649 = vpack.c.b16 %v1587, %v1585
    %v1650 = vpack.c.b16 %v1590, %v1588
    %v1651 = vpack.c.b16 %v1591, %v1589
    %v1652 = vpack.c.b16 %v1594, %v1592
    %v1653 = vpack.c.b16 %v1595, %v1593
    %v1654 = vpack.c.b16 %v1598, %v1596
    %v1655 = vpack.c.b16 %v1599, %v1597
    %v1656 = vpack.c.b16 %v1602, %v1600
    %v1657 = vpack.c.b16 %v1603, %v1601
    %v1658 = vpack.c.b16 %v1606, %v1604
    %v1659 = vpack.c.b16 %v1607, %v1605
    %v1660 = vpack.c.b16 %v1610, %v1608
    %v1661 = vpack.c.b16 %v1611, %v1609
    %v1662 = vpack.c.b16 %v1614, %v1612
    %v1663 = vpack.c.b16 %v1615, %v1613
    %v1664 = vpack.c.b16 %v1618, %v1616
    %v1665 = vpack.c.b16 %v1619, %v1617
    %v1666 = vpack.c.b16 %v1622, %v1620
    %v1667 = vpack.c.b16 %v1623, %v1621
    %v1668 = vpack.c.b16 %v1626, %v1624
    %v1669 = vpack.c.b16 %v1627, %v1625
    %v1670 = vpack.c.b16 %v1630, %v1628
    %v1671 = vpack.c.b16 %v1631, %v1629
    %v1672 = vpack.c.b16 %v1634, %v1632
    %v1673 = vpack.c.b16 %v1635, %v1633
    %v1674 = vpack.c.b16 %v1638, %v1636
    %v1675 = vpack.c.b16 %v1639, %v1637
    %v1676 = vpack.c.b16 %v1642, %v1640
    %v1677 = vpack.c.b16 %v1643, %v1641
    %v1678 = vpack.c.b16 %v1646, %v1644
    %v1679 = vpack.c.b16 %v1647, %v1645
    %1712 = vmatprep.subr.bf16.mxu0 %v1649
    %1713 = vmatpush1.bf16.msra.mxu0 %v1648
    %1714 = vmatprep.subr.bf16.mxu0 %v1651
    %1715 = vmatpush1.bf16.msra.mxu0 %v1650
    %1716 = vmatprep.subr.bf16.mxu0 %v1653
    %1717 = vmatpush1.bf16.msra.mxu0 %v1652
    %1718 = vmatprep.subr.bf16.mxu0 %v1655
    %1719 = vmatpush1.bf16.msra.mxu0 %v1654
    %1720 = vmatprep.subr.bf16.mxu0 %v1657
    %1721 = vmatpush1.bf16.msra.mxu0 %v1656
    %1722 = vmatprep.subr.bf16.mxu0 %v1659
    %1723 = vmatpush1.bf16.msra.mxu0 %v1658
    %1724 = vmatprep.subr.bf16.mxu0 %v1661
    %1725 = vmatpush1.bf16.msra.mxu0 %v1660
    %1726 = vmatprep.subr.bf16.mxu0 %v1663
    %1727 = vmatpush1.bf16.msra.mxu0 %v1662
    %1728 = vmatprep.subr.bf16.mxu0 %v1665
    %1729 = vmatpush1.bf16.msra.mxu0 %v1664
    %1730 = vmatprep.subr.bf16.mxu0 %v1667
    %1731 = vmatpush1.bf16.msra.mxu0 %v1666
    %1732 = vmatprep.subr.bf16.mxu0 %v1669
    %1733 = vmatpush1.bf16.msra.mxu0 %v1668
    %1734 = vmatprep.subr.bf16.mxu0 %v1671
    %1735 = vmatpush1.bf16.msra.mxu0 %v1670
    %1736 = vmatprep.subr.bf16.mxu0 %v1673
    %1737 = vmatpush1.bf16.msra.mxu0 %v1672
    %1738 = vmatprep.subr.bf16.mxu0 %v1675
    %1739 = vmatpush1.bf16.msra.mxu0 %v1674
    %1740 = vmatprep.subr.bf16.mxu0 %v1677
    %1741 = vmatpush1.bf16.msra.mxu0 %v1676
    %1742 = vmatprep.subr.bf16.mxu0 %v1679
    %1743 = vmatpush1.bf16.msra.mxu0 %v1678
    %1744 = vmatprep.mubr.bf16.mxu0 %v1505
    %1745 = vmatmul.mubr.bf16.gmra.mrb[0].mxu0 %v1504
    %v1746 = vpop.f32.mrb[0].mxu0
    %v1747 = vadd.f32 %v1545, %v1746
    %v1748 = vpop.f32.mrb[0].mxu0
    %v1749 = vadd.f32 %v1549, %v1748
    %v1750 = vpop.f32.mrb[0].mxu0
    %v1751 = vpop.f32.mrb[0].mxu0
    %1752 = vdwg.mxu0
    %vm1753 = vcmp.ge.f32.partialorder %v1747, 0.0
    %vm1754 = vcmp.ge.f32.partialorder %v1749, 0.0
    %v1755 = vmul.f32 %v1747, 0.2
    %v1756 = vmul.f32 %v1749, 0.2
    %v1757 = vsel %vm1753, %v1747, %v1755
    %v1758 = vsel %vm1754, %v1749, %v1756
    %v1759 = vpack.c.bf16 %v1757, %v1757
    %v1760 = vpack.c.bf16 %v1758, %v1758
    %s1761 = scalar_lea.vmem [#allocation10], 1024
    %v1762 = vld [vmem:[%s1761] sm:$0xff]
    %v1763 = vld [vmem:[%s1761 + $0x8] sm:$0xff]
    %v1764 = vld [vmem:[%s1761 + $0x10] sm:$0xff]
    %v1765 = vld [vmem:[%s1761 + $0x18] sm:$0xff]
    %v1766 = vld [vmem:[%s1761 + $0x20] sm:$0xff]
    %v1767 = vld [vmem:[%s1761 + $0x28] sm:$0xff]
    %v1768 = vld [vmem:[%s1761 + $0x30] sm:$0xff]
    %v1769 = vld [vmem:[%s1761 + $0x38] sm:$0xff]
    %v1770 = vld [vmem:[%s1761 + $0x40] sm:$0xff]
    %v1771 = vld [vmem:[%s1761 + $0x48] sm:$0xff]
    %v1772 = vld [vmem:[%s1761 + $0x50] sm:$0xff]
    %v1773 = vld [vmem:[%s1761 + $0x58] sm:$0xff]
    %v1774 = vld [vmem:[%s1761 + $0x60] sm:$0xff]
    %v1775 = vld [vmem:[%s1761 + $0x68] sm:$0xff]
    %v1776 = vld [vmem:[%s1761 + $0x70] sm:$0xff]
    %v1777 = vld [vmem:[%s1761 + $0x78] sm:$0xff]
    %v1778 = vld [vmem:[%s1761 + $0x80] sm:$0xff]
    %v1779 = vld [vmem:[%s1761 + $0x88] sm:$0xff]
    %v1780 = vld [vmem:[%s1761 + $0x90] sm:$0xff]
    %v1781 = vld [vmem:[%s1761 + $0x98] sm:$0xff]
    %v1782 = vld [vmem:[%s1761 + $0xa0] sm:$0xff]
    %v1783 = vld [vmem:[%s1761 + $0xa8] sm:$0xff]
    %v1784 = vld [vmem:[%s1761 + $0xb0] sm:$0xff]
    %v1785 = vld [vmem:[%s1761 + $0xb8] sm:$0xff]
    %v1786 = vld [vmem:[%s1761 + $0xc0] sm:$0xff]
    %v1787 = vld [vmem:[%s1761 + $0xc8] sm:$0xff]
    %v1788 = vld [vmem:[%s1761 + $0xd0] sm:$0xff]
    %v1789 = vld [vmem:[%s1761 + $0xd8] sm:$0xff]
    %v1790 = vld [vmem:[%s1761 + $0xe0] sm:$0xff]
    %v1791 = vld [vmem:[%s1761 + $0xe8] sm:$0xff]
    %v1792 = vld [vmem:[%s1761 + $0xf0] sm:$0xff]
    %v1793 = vld [vmem:[%s1761 + $0xf8] sm:$0xff]
    %s1794 = scalar_lea.vmem %s7, 8
    %v1795 = vld [vmem:[%s1794] sm:$0x3]
    %v1797 = vlaneseq
    %v1798 = vshrl.u32 %v1797, 7
    %v1799 = vsub.s32 0, %v1798
    %v1800 = vrot.slane %v1795, %v1799
    %v1801 = vlaneseq
    %v1802 = vshrl.u32 %v1801, 7
    %v1803 = vsub.s32 1, %v1802
    %v1804 = vrot.slane %v1795, %v1803
    %v1839 = vunpack.c.l.b16 %v1762
    %v1840 = vunpack.c.h.b16 %v1762
    %v1841 = vunpack.c.l.b16 %v1763
    %v1842 = vunpack.c.h.b16 %v1763
    %v1843 = vunpack.c.l.b16 %v1764
    %v1844 = vunpack.c.h.b16 %v1764
    %v1845 = vunpack.c.l.b16 %v1765
    %v1846 = vunpack.c.h.b16 %v1765
    %v1847 = vunpack.c.l.b16 %v1766
    %v1848 = vunpack.c.h.b16 %v1766
    %v1849 = vunpack.c.l.b16 %v1767
    %v1850 = vunpack.c.h.b16 %v1767
    %v1851 = vunpack.c.l.b16 %v1768
    %v1852 = vunpack.c.h.b16 %v1768
    %v1853 = vunpack.c.l.b16 %v1769
    %v1854 = vunpack.c.h.b16 %v1769
    %v1855 = vunpack.c.l.b16 %v1770
    %v1856 = vunpack.c.h.b16 %v1770
    %v1857 = vunpack.c.l.b16 %v1771
    %v1858 = vunpack.c.h.b16 %v1771
    %v1859 = vunpack.c.l.b16 %v1772
    %v1860 = vunpack.c.h.b16 %v1772
    %v1861 = vunpack.c.l.b16 %v1773
    %v1862 = vunpack.c.h.b16 %v1773
    %v1863 = vunpack.c.l.b16 %v1774
    %v1864 = vunpack.c.h.b16 %v1774
    %v1865 = vunpack.c.l.b16 %v1775
    %v1866 = vunpack.c.h.b16 %v1775
    %v1867 = vunpack.c.l.b16 %v1776
    %v1868 = vunpack.c.h.b16 %v1776
    %v1869 = vunpack.c.l.b16 %v1777
    %v1870 = vunpack.c.h.b16 %v1777
    %v1871 = vunpack.c.l.b16 %v1778
    %v1872 = vunpack.c.h.b16 %v1778
    %v1873 = vunpack.c.l.b16 %v1779
    %v1874 = vunpack.c.h.b16 %v1779
    %v1875 = vunpack.c.l.b16 %v1780
    %v1876 = vunpack.c.h.b16 %v1780
    %v1877 = vunpack.c.l.b16 %v1781
    %v1878 = vunpack.c.h.b16 %v1781
    %v1879 = vunpack.c.l.b16 %v1782
    %v1880 = vunpack.c.h.b16 %v1782
    %v1881 = vunpack.c.l.b16 %v1783
    %v1882 = vunpack.c.h.b16 %v1783
    %v1883 = vunpack.c.l.b16 %v1784
    %v1884 = vunpack.c.h.b16 %v1784
    %v1885 = vunpack.c.l.b16 %v1785
    %v1886 = vunpack.c.h.b16 %v1785
    %v1887 = vunpack.c.l.b16 %v1786
    %v1888 = vunpack.c.h.b16 %v1786
    %v1889 = vunpack.c.l.b16 %v1787
    %v1890 = vunpack.c.h.b16 %v1787
    %v1891 = vunpack.c.l.b16 %v1788
    %v1892 = vunpack.c.h.b16 %v1788
    %v1893 = vunpack.c.l.b16 %v1789
    %v1894 = vunpack.c.h.b16 %v1789
    %v1895 = vunpack.c.l.b16 %v1790
    %v1896 = vunpack.c.h.b16 %v1790
    %v1897 = vunpack.c.l.b16 %v1791
    %v1898 = vunpack.c.h.b16 %v1791
    %v1899 = vunpack.c.l.b16 %v1792
    %v1900 = vunpack.c.h.b16 %v1792
    %v1901 = vunpack.c.l.b16 %v1793
    %v1902 = vunpack.c.h.b16 %v1793
    %v1903 = vpack.c.b16 %v1841, %v1839
    %v1904 = vpack.c.b16 %v1842, %v1840
    %v1905 = vpack.c.b16 %v1845, %v1843
    %v1906 = vpack.c.b16 %v1846, %v1844
    %v1907 = vpack.c.b16 %v1849, %v1847
    %v1908 = vpack.c.b16 %v1850, %v1848
    %v1909 = vpack.c.b16 %v1853, %v1851
    %v1910 = vpack.c.b16 %v1854, %v1852
    %v1911 = vpack.c.b16 %v1857, %v1855
    %v1912 = vpack.c.b16 %v1858, %v1856
    %v1913 = vpack.c.b16 %v1861, %v1859
    %v1914 = vpack.c.b16 %v1862, %v1860
    %v1915 = vpack.c.b16 %v1865, %v1863
    %v1916 = vpack.c.b16 %v1866, %v1864
    %v1917 = vpack.c.b16 %v1869, %v1867
    %v1918 = vpack.c.b16 %v1870, %v1868
    %v1919 = vpack.c.b16 %v1873, %v1871
    %v1920 = vpack.c.b16 %v1874, %v1872
    %v1921 = vpack.c.b16 %v1877, %v1875
    %v1922 = vpack.c.b16 %v1878, %v1876
    %v1923 = vpack.c.b16 %v1881, %v1879
    %v1924 = vpack.c.b16 %v1882, %v1880
    %v1925 = vpack.c.b16 %v1885, %v1883
    %v1926 = vpack.c.b16 %v1886, %v1884
    %v1927 = vpack.c.b16 %v1889, %v1887
    %v1928 = vpack.c.b16 %v1890, %v1888
    %v1929 = vpack.c.b16 %v1893, %v1891
    %v1930 = vpack.c.b16 %v1894, %v1892
    %v1931 = vpack.c.b16 %v1897, %v1895
    %v1932 = vpack.c.b16 %v1898, %v1896
    %v1933 = vpack.c.b16 %v1901, %v1899
    %v1934 = vpack.c.b16 %v1902, %v1900
    %1967 = vmatprep.subr.bf16.mxu0 %v1904
    %1968 = vmatpush1.bf16.msra.mxu0 %v1903
    %1969 = vmatprep.subr.bf16.mxu0 %v1906
    %1970 = vmatpush1.bf16.msra.mxu0 %v1905
    %1971 = vmatprep.subr.bf16.mxu0 %v1908
    %1972 = vmatpush1.bf16.msra.mxu0 %v1907
    %1973 = vmatprep.subr.bf16.mxu0 %v1910
    %1974 = vmatpush1.bf16.msra.mxu0 %v1909
    %1975 = vmatprep.subr.bf16.mxu0 %v1912
    %1976 = vmatpush1.bf16.msra.mxu0 %v1911
    %1977 = vmatprep.subr.bf16.mxu0 %v1914
    %1978 = vmatpush1.bf16.msra.mxu0 %v1913
    %1979 = vmatprep.subr.bf16.mxu0 %v1916
    %1980 = vmatpush1.bf16.msra.mxu0 %v1915
    %1981 = vmatprep.subr.bf16.mxu0 %v1918
    %1982 = vmatpush1.bf16.msra.mxu0 %v1917
    %1983 = vmatprep.subr.bf16.mxu0 %v1920
    %1984 = vmatpush1.bf16.msra.mxu0 %v1919
    %1985 = vmatprep.subr.bf16.mxu0 %v1922
    %1986 = vmatpush1.bf16.msra.mxu0 %v1921
    %1987 = vmatprep.subr.bf16.mxu0 %v1924
    %1988 = vmatpush1.bf16.msra.mxu0 %v1923
    %1989 = vmatprep.subr.bf16.mxu0 %v1926
    %1990 = vmatpush1.bf16.msra.mxu0 %v1925
    %1991 = vmatprep.subr.bf16.mxu0 %v1928
    %1992 = vmatpush1.bf16.msra.mxu0 %v1927
    %1993 = vmatprep.subr.bf16.mxu0 %v1930
    %1994 = vmatpush1.bf16.msra.mxu0 %v1929
    %1995 = vmatprep.subr.bf16.mxu0 %v1932
    %1996 = vmatpush1.bf16.msra.mxu0 %v1931
    %1997 = vmatprep.subr.bf16.mxu0 %v1934
    %1998 = vmatpush1.bf16.msra.mxu0 %v1933
    %1999 = vmatprep.mubr.bf16.mxu0 %v1760
    %2000 = vmatmul.mubr.bf16.gmra.mrb[0].mxu0 %v1759
    %v2001 = vpop.f32.mrb[0].mxu0
    %v2002 = vadd.f32 %v1800, %v2001
    %v2003 = vpop.f32.mrb[0].mxu0
    %v2004 = vadd.f32 %v1804, %v2003
    %v2005 = vpop.f32.mrb[0].mxu0
    %v2006 = vpop.f32.mrb[0].mxu0
    %2007 = vdwg.mxu0
    %vm2008 = vcmp.ge.f32.partialorder %v2002, 0.0
    %vm2009 = vcmp.ge.f32.partialorder %v2004, 0.0
    %v2010 = vmul.f32 %v2002, 0.2
    %v2011 = vmul.f32 %v2004, 0.2
    %v2012 = vsel %vm2008, %v2002, %v2010
    %v2013 = vsel %vm2009, %v2004, %v2011
    %v2014 = vpack.c.bf16 %v2012, %v2012
    %v2015 = vpack.c.bf16 %v2013, %v2013
    %s2016 = scalar_lea.vmem [#allocation10], 1280
    %v2017 = vld [vmem:[%s2016] sm:$0xff]
    %v2018 = vld [vmem:[%s2016 + $0x8] sm:$0xff]
    %v2019 = vld [vmem:[%s2016 + $0x10] sm:$0xff]
    %v2020 = vld [vmem:[%s2016 + $0x18] sm:$0xff]
    %v2021 = vld [vmem:[%s2016 + $0x20] sm:$0xff]
    %v2022 = vld [vmem:[%s2016 + $0x28] sm:$0xff]
    %v2023 = vld [vmem:[%s2016 + $0x30] sm:$0xff]
    %v2024 = vld [vmem:[%s2016 + $0x38] sm:$0xff]
    %v2025 = vld [vmem:[%s2016 + $0x40] sm:$0xff]
    %v2026 = vld [vmem:[%s2016 + $0x48] sm:$0xff]
    %v2027 = vld [vmem:[%s2016 + $0x50] sm:$0xff]
    %v2028 = vld [vmem:[%s2016 + $0x58] sm:$0xff]
    %v2029 = vld [vmem:[%s2016 + $0x60] sm:$0xff]
    %v2030 = vld [vmem:[%s2016 + $0x68] sm:$0xff]
    %v2031 = vld [vmem:[%s2016 + $0x70] sm:$0xff]
    %v2032 = vld [vmem:[%s2016 + $0x78] sm:$0xff]
    %v2033 = vld [vmem:[%s2016 + $0x80] sm:$0xff]
    %v2034 = vld [vmem:[%s2016 + $0x88] sm:$0xff]
    %v2035 = vld [vmem:[%s2016 + $0x90] sm:$0xff]
    %v2036 = vld [vmem:[%s2016 + $0x98] sm:$0xff]
    %v2037 = vld [vmem:[%s2016 + $0xa0] sm:$0xff]
    %v2038 = vld [vmem:[%s2016 + $0xa8] sm:$0xff]
    %v2039 = vld [vmem:[%s2016 + $0xb0] sm:$0xff]
    %v2040 = vld [vmem:[%s2016 + $0xb8] sm:$0xff]
    %v2041 = vld [vmem:[%s2016 + $0xc0] sm:$0xff]
    %v2042 = vld [vmem:[%s2016 + $0xc8] sm:$0xff]
    %v2043 = vld [vmem:[%s2016 + $0xd0] sm:$0xff]
    %v2044 = vld [vmem:[%s2016 + $0xd8] sm:$0xff]
    %v2045 = vld [vmem:[%s2016 + $0xe0] sm:$0xff]
    %v2046 = vld [vmem:[%s2016 + $0xe8] sm:$0xff]
    %v2047 = vld [vmem:[%s2016 + $0xf0] sm:$0xff]
    %v2048 = vld [vmem:[%s2016 + $0xf8] sm:$0xff]
    %s2049 = scalar_lea.vmem %s7, 10
    %v2050 = vld [vmem:[%s2049] sm:$0x3]
    %v2052 = vlaneseq
    %v2053 = vshrl.u32 %v2052, 7
    %v2054 = vsub.s32 0, %v2053
    %v2055 = vrot.slane %v2050, %v2054
    %v2056 = vlaneseq
    %v2057 = vshrl.u32 %v2056, 7
    %v2058 = vsub.s32 1, %v2057
    %v2059 = vrot.slane %v2050, %v2058
    %v2094 = vunpack.c.l.b16 %v2017
    %v2095 = vunpack.c.h.b16 %v2017
    %v2096 = vunpack.c.l.b16 %v2018
    %v2097 = vunpack.c.h.b16 %v2018
    %v2098 = vunpack.c.l.b16 %v2019
    %v2099 = vunpack.c.h.b16 %v2019
    %v2100 = vunpack.c.l.b16 %v2020
    %v2101 = vunpack.c.h.b16 %v2020
    %v2102 = vunpack.c.l.b16 %v2021
    %v2103 = vunpack.c.h.b16 %v2021
    %v2104 = vunpack.c.l.b16 %v2022
    %v2105 = vunpack.c.h.b16 %v2022
    %v2106 = vunpack.c.l.b16 %v2023
    %v2107 = vunpack.c.h.b16 %v2023
    %v2108 = vunpack.c.l.b16 %v2024
    %v2109 = vunpack.c.h.b16 %v2024
    %v2110 = vunpack.c.l.b16 %v2025
    %v2111 = vunpack.c.h.b16 %v2025
    %v2112 = vunpack.c.l.b16 %v2026
    %v2113 = vunpack.c.h.b16 %v2026
    %v2114 = vunpack.c.l.b16 %v2027
    %v2115 = vunpack.c.h.b16 %v2027
    %v2116 = vunpack.c.l.b16 %v2028
    %v2117 = vunpack.c.h.b16 %v2028
    %v2118 = vunpack.c.l.b16 %v2029
    %v2119 = vunpack.c.h.b16 %v2029
    %v2120 = vunpack.c.l.b16 %v2030
    %v2121 = vunpack.c.h.b16 %v2030
    %v2122 = vunpack.c.l.b16 %v2031
    %v2123 = vunpack.c.h.b16 %v2031
    %v2124 = vunpack.c.l.b16 %v2032
    %v2125 = vunpack.c.h.b16 %v2032
    %v2126 = vunpack.c.l.b16 %v2033
    %v2127 = vunpack.c.h.b16 %v2033
    %v2128 = vunpack.c.l.b16 %v2034
    %v2129 = vunpack.c.h.b16 %v2034
    %v2130 = vunpack.c.l.b16 %v2035
    %v2131 = vunpack.c.h.b16 %v2035
    %v2132 = vunpack.c.l.b16 %v2036
    %v2133 = vunpack.c.h.b16 %v2036
    %v2134 = vunpack.c.l.b16 %v2037
    %v2135 = vunpack.c.h.b16 %v2037
    %v2136 = vunpack.c.l.b16 %v2038
    %v2137 = vunpack.c.h.b16 %v2038
    %v2138 = vunpack.c.l.b16 %v2039
    %v2139 = vunpack.c.h.b16 %v2039
    %v2140 = vunpack.c.l.b16 %v2040
    %v2141 = vunpack.c.h.b16 %v2040
    %v2142 = vunpack.c.l.b16 %v2041
    %v2143 = vunpack.c.h.b16 %v2041
    %v2144 = vunpack.c.l.b16 %v2042
    %v2145 = vunpack.c.h.b16 %v2042
    %v2146 = vunpack.c.l.b16 %v2043
    %v2147 = vunpack.c.h.b16 %v2043
    %v2148 = vunpack.c.l.b16 %v2044
    %v2149 = vunpack.c.h.b16 %v2044
    %v2150 = vunpack.c.l.b16 %v2045
    %v2151 = vunpack.c.h.b16 %v2045
    %v2152 = vunpack.c.l.b16 %v2046
    %v2153 = vunpack.c.h.b16 %v2046
    %v2154 = vunpack.c.l.b16 %v2047
    %v2155 = vunpack.c.h.b16 %v2047
    %v2156 = vunpack.c.l.b16 %v2048
    %v2157 = vunpack.c.h.b16 %v2048
    %v2158 = vpack.c.b16 %v2096, %v2094
    %v2159 = vpack.c.b16 %v2097, %v2095
    %v2160 = vpack.c.b16 %v2100, %v2098
    %v2161 = vpack.c.b16 %v2101, %v2099
    %v2162 = vpack.c.b16 %v2104, %v2102
    %v2163 = vpack.c.b16 %v2105, %v2103
    %v2164 = vpack.c.b16 %v2108, %v2106
    %v2165 = vpack.c.b16 %v2109, %v2107
    %v2166 = vpack.c.b16 %v2112, %v2110
    %v2167 = vpack.c.b16 %v2113, %v2111
    %v2168 = vpack.c.b16 %v2116, %v2114
    %v2169 = vpack.c.b16 %v2117, %v2115
    %v2170 = vpack.c.b16 %v2120, %v2118
    %v2171 = vpack.c.b16 %v2121, %v2119
    %v2172 = vpack.c.b16 %v2124, %v2122
    %v2173 = vpack.c.b16 %v2125, %v2123
    %v2174 = vpack.c.b16 %v2128, %v2126
    %v2175 = vpack.c.b16 %v2129, %v2127
    %v2176 = vpack.c.b16 %v2132, %v2130
    %v2177 = vpack.c.b16 %v2133, %v2131
    %v2178 = vpack.c.b16 %v2136, %v2134
    %v2179 = vpack.c.b16 %v2137, %v2135
    %v2180 = vpack.c.b16 %v2140, %v2138
    %v2181 = vpack.c.b16 %v2141, %v2139
    %v2182 = vpack.c.b16 %v2144, %v2142
    %v2183 = vpack.c.b16 %v2145, %v2143
    %v2184 = vpack.c.b16 %v2148, %v2146
    %v2185 = vpack.c.b16 %v2149, %v2147
    %v2186 = vpack.c.b16 %v2152, %v2150
    %v2187 = vpack.c.b16 %v2153, %v2151
    %v2188 = vpack.c.b16 %v2156, %v2154
    %v2189 = vpack.c.b16 %v2157, %v2155
    %2222 = vmatprep.subr.bf16.mxu0 %v2159
    %2223 = vmatpush1.bf16.msra.mxu0 %v2158
    %2224 = vmatprep.subr.bf16.mxu0 %v2161
    %2225 = vmatpush1.bf16.msra.mxu0 %v2160
    %2226 = vmatprep.subr.bf16.mxu0 %v2163
    %2227 = vmatpush1.bf16.msra.mxu0 %v2162
    %2228 = vmatprep.subr.bf16.mxu0 %v2165
    %2229 = vmatpush1.bf16.msra.mxu0 %v2164
    %2230 = vmatprep.subr.bf16.mxu0 %v2167
    %2231 = vmatpush1.bf16.msra.mxu0 %v2166
    %2232 = vmatprep.subr.bf16.mxu0 %v2169
    %2233 = vmatpush1.bf16.msra.mxu0 %v2168
    %2234 = vmatprep.subr.bf16.mxu0 %v2171
    %2235 = vmatpush1.bf16.msra.mxu0 %v2170
    %2236 = vmatprep.subr.bf16.mxu0 %v2173
    %2237 = vmatpush1.bf16.msra.mxu0 %v2172
    %2238 = vmatprep.subr.bf16.mxu0 %v2175
    %2239 = vmatpush1.bf16.msra.mxu0 %v2174
    %2240 = vmatprep.subr.bf16.mxu0 %v2177
    %2241 = vmatpush1.bf16.msra.mxu0 %v2176
    %2242 = vmatprep.subr.bf16.mxu0 %v2179
    %2243 = vmatpush1.bf16.msra.mxu0 %v2178
    %2244 = vmatprep.subr.bf16.mxu0 %v2181
    %2245 = vmatpush1.bf16.msra.mxu0 %v2180
    %2246 = vmatprep.subr.bf16.mxu0 %v2183
    %2247 = vmatpush1.bf16.msra.mxu0 %v2182
    %2248 = vmatprep.subr.bf16.mxu0 %v2185
    %2249 = vmatpush1.bf16.msra.mxu0 %v2184
    %2250 = vmatprep.subr.bf16.mxu0 %v2187
    %2251 = vmatpush1.bf16.msra.mxu0 %v2186
    %2252 = vmatprep.subr.bf16.mxu0 %v2189
    %2253 = vmatpush1.bf16.msra.mxu0 %v2188
    %2254 = vmatprep.mubr.bf16.mxu0 %v2015
    %2255 = vmatmul.mubr.bf16.gmra.mrb[0].mxu0 %v2014
    %v2256 = vpop.f32.mrb[0].mxu0
    %v2257 = vadd.f32 %v2055, %v2256
    %v2258 = vpop.f32.mrb[0].mxu0
    %v2259 = vadd.f32 %v2059, %v2258
    %v2260 = vpop.f32.mrb[0].mxu0
    %v2261 = vpop.f32.mrb[0].mxu0
    %2262 = vdwg.mxu0
    %vm2263 = vcmp.ge.f32.partialorder %v2257, 0.0
    %vm2264 = vcmp.ge.f32.partialorder %v2259, 0.0
    %v2265 = vmul.f32 %v2257, 0.2
    %v2266 = vmul.f32 %v2259, 0.2
    %v2267 = vsel %vm2263, %v2257, %v2265
    %v2268 = vsel %vm2264, %v2259, %v2266
    %v2269 = vpack.c.bf16 %v2267, %v2267
    %v2270 = vpack.c.bf16 %v2268, %v2268
    %s2271 = scalar_lea.vmem [#allocation10], 1536
    %v2272 = vld [vmem:[%s2271] sm:$0xff]
    %v2273 = vld [vmem:[%s2271 + $0x8] sm:$0xff]
    %v2274 = vld [vmem:[%s2271 + $0x10] sm:$0xff]
    %v2275 = vld [vmem:[%s2271 + $0x18] sm:$0xff]
    %v2276 = vld [vmem:[%s2271 + $0x20] sm:$0xff]
    %v2277 = vld [vmem:[%s2271 + $0x28] sm:$0xff]
    %v2278 = vld [vmem:[%s2271 + $0x30] sm:$0xff]
    %v2279 = vld [vmem:[%s2271 + $0x38] sm:$0xff]
    %v2280 = vld [vmem:[%s2271 + $0x40] sm:$0xff]
    %v2281 = vld [vmem:[%s2271 + $0x48] sm:$0xff]
    %v2282 = vld [vmem:[%s2271 + $0x50] sm:$0xff]
    %v2283 = vld [vmem:[%s2271 + $0x58] sm:$0xff]
    %v2284 = vld [vmem:[%s2271 + $0x60] sm:$0xff]
    %v2285 = vld [vmem:[%s2271 + $0x68] sm:$0xff]
    %v2286 = vld [vmem:[%s2271 + $0x70] sm:$0xff]
    %v2287 = vld [vmem:[%s2271 + $0x78] sm:$0xff]
    %v2288 = vld [vmem:[%s2271 + $0x80] sm:$0xff]
    %v2289 = vld [vmem:[%s2271 + $0x88] sm:$0xff]
    %v2290 = vld [vmem:[%s2271 + $0x90] sm:$0xff]
    %v2291 = vld [vmem:[%s2271 + $0x98] sm:$0xff]
    %v2292 = vld [vmem:[%s2271 + $0xa0] sm:$0xff]
    %v2293 = vld [vmem:[%s2271 + $0xa8] sm:$0xff]
    %v2294 = vld [vmem:[%s2271 + $0xb0] sm:$0xff]
    %v2295 = vld [vmem:[%s2271 + $0xb8] sm:$0xff]
    %v2296 = vld [vmem:[%s2271 + $0xc0] sm:$0xff]
    %v2297 = vld [vmem:[%s2271 + $0xc8] sm:$0xff]
    %v2298 = vld [vmem:[%s2271 + $0xd0] sm:$0xff]
    %v2299 = vld [vmem:[%s2271 + $0xd8] sm:$0xff]
    %v2300 = vld [vmem:[%s2271 + $0xe0] sm:$0xff]
    %v2301 = vld [vmem:[%s2271 + $0xe8] sm:$0xff]
    %v2302 = vld [vmem:[%s2271 + $0xf0] sm:$0xff]
    %v2303 = vld [vmem:[%s2271 + $0xf8] sm:$0xff]
    %s2304 = scalar_lea.vmem %s7, 12
    %v2305 = vld [vmem:[%s2304] sm:$0x3]
    %v2307 = vlaneseq
    %v2308 = vshrl.u32 %v2307, 7
    %v2309 = vsub.s32 0, %v2308
    %v2310 = vrot.slane %v2305, %v2309
    %v2311 = vlaneseq
    %v2312 = vshrl.u32 %v2311, 7
    %v2313 = vsub.s32 1, %v2312
    %v2314 = vrot.slane %v2305, %v2313
    %v2349 = vunpack.c.l.b16 %v2272
    %v2350 = vunpack.c.h.b16 %v2272
    %v2351 = vunpack.c.l.b16 %v2273
    %v2352 = vunpack.c.h.b16 %v2273
    %v2353 = vunpack.c.l.b16 %v2274
    %v2354 = vunpack.c.h.b16 %v2274
    %v2355 = vunpack.c.l.b16 %v2275
    %v2356 = vunpack.c.h.b16 %v2275
    %v2357 = vunpack.c.l.b16 %v2276
    %v2358 = vunpack.c.h.b16 %v2276
    %v2359 = vunpack.c.l.b16 %v2277
    %v2360 = vunpack.c.h.b16 %v2277
    %v2361 = vunpack.c.l.b16 %v2278
    %v2362 = vunpack.c.h.b16 %v2278
    %v2363 = vunpack.c.l.b16 %v2279
    %v2364 = vunpack.c.h.b16 %v2279
    %v2365 = vunpack.c.l.b16 %v2280
    %v2366 = vunpack.c.h.b16 %v2280
    %v2367 = vunpack.c.l.b16 %v2281
    %v2368 = vunpack.c.h.b16 %v2281
    %v2369 = vunpack.c.l.b16 %v2282
    %v2370 = vunpack.c.h.b16 %v2282
    %v2371 = vunpack.c.l.b16 %v2283
    %v2372 = vunpack.c.h.b16 %v2283
    %v2373 = vunpack.c.l.b16 %v2284
    %v2374 = vunpack.c.h.b16 %v2284
    %v2375 = vunpack.c.l.b16 %v2285
    %v2376 = vunpack.c.h.b16 %v2285
    %v2377 = vunpack.c.l.b16 %v2286
    %v2378 = vunpack.c.h.b16 %v2286
    %v2379 = vunpack.c.l.b16 %v2287
    %v2380 = vunpack.c.h.b16 %v2287
    %v2381 = vunpack.c.l.b16 %v2288
    %v2382 = vunpack.c.h.b16 %v2288
    %v2383 = vunpack.c.l.b16 %v2289
    %v2384 = vunpack.c.h.b16 %v2289
    %v2385 = vunpack.c.l.b16 %v2290
    %v2386 = vunpack.c.h.b16 %v2290
    %v2387 = vunpack.c.l.b16 %v2291
    %v2388 = vunpack.c.h.b16 %v2291
    %v2389 = vunpack.c.l.b16 %v2292
    %v2390 = vunpack.c.h.b16 %v2292
    %v2391 = vunpack.c.l.b16 %v2293
    %v2392 = vunpack.c.h.b16 %v2293
    %v2393 = vunpack.c.l.b16 %v2294
    %v2394 = vunpack.c.h.b16 %v2294
    %v2395 = vunpack.c.l.b16 %v2295
    %v2396 = vunpack.c.h.b16 %v2295
    %v2397 = vunpack.c.l.b16 %v2296
    %v2398 = vunpack.c.h.b16 %v2296
    %v2399 = vunpack.c.l.b16 %v2297
    %v2400 = vunpack.c.h.b16 %v2297
    %v2401 = vunpack.c.l.b16 %v2298
    %v2402 = vunpack.c.h.b16 %v2298
    %v2403 = vunpack.c.l.b16 %v2299
    %v2404 = vunpack.c.h.b16 %v2299
    %v2405 = vunpack.c.l.b16 %v2300
    %v2406 = vunpack.c.h.b16 %v2300
    %v2407 = vunpack.c.l.b16 %v2301
    %v2408 = vunpack.c.h.b16 %v2301
    %v2409 = vunpack.c.l.b16 %v2302
    %v2410 = vunpack.c.h.b16 %v2302
    %v2411 = vunpack.c.l.b16 %v2303
    %v2412 = vunpack.c.h.b16 %v2303
    %v2413 = vpack.c.b16 %v2351, %v2349
    %v2414 = vpack.c.b16 %v2352, %v2350
    %v2415 = vpack.c.b16 %v2355, %v2353
    %v2416 = vpack.c.b16 %v2356, %v2354
    %v2417 = vpack.c.b16 %v2359, %v2357
    %v2418 = vpack.c.b16 %v2360, %v2358
    %v2419 = vpack.c.b16 %v2363, %v2361
    %v2420 = vpack.c.b16 %v2364, %v2362
    %v2421 = vpack.c.b16 %v2367, %v2365
    %v2422 = vpack.c.b16 %v2368, %v2366
    %v2423 = vpack.c.b16 %v2371, %v2369
    %v2424 = vpack.c.b16 %v2372, %v2370
    %v2425 = vpack.c.b16 %v2375, %v2373
    %v2426 = vpack.c.b16 %v2376, %v2374
    %v2427 = vpack.c.b16 %v2379, %v2377
    %v2428 = vpack.c.b16 %v2380, %v2378
    %v2429 = vpack.c.b16 %v2383, %v2381
    %v2430 = vpack.c.b16 %v2384, %v2382
    %v2431 = vpack.c.b16 %v2387, %v2385
    %v2432 = vpack.c.b16 %v2388, %v2386
    %v2433 = vpack.c.b16 %v2391, %v2389
    %v2434 = vpack.c.b16 %v2392, %v2390
    %v2435 = vpack.c.b16 %v2395, %v2393
    %v2436 = vpack.c.b16 %v2396, %v2394
    %v2437 = vpack.c.b16 %v2399, %v2397
    %v2438 = vpack.c.b16 %v2400, %v2398
    %v2439 = vpack.c.b16 %v2403, %v2401
    %v2440 = vpack.c.b16 %v2404, %v2402
    %v2441 = vpack.c.b16 %v2407, %v2405
    %v2442 = vpack.c.b16 %v2408, %v2406
    %v2443 = vpack.c.b16 %v2411, %v2409
    %v2444 = vpack.c.b16 %v2412, %v2410
    %2477 = vmatprep.subr.bf16.mxu0 %v2414
    %2478 = vmatpush1.bf16.msra.mxu0 %v2413
    %2479 = vmatprep.subr.bf16.mxu0 %v2416
    %2480 = vmatpush1.bf16.msra.mxu0 %v2415
    %2481 = vmatprep.subr.bf16.mxu0 %v2418
    %2482 = vmatpush1.bf16.msra.mxu0 %v2417
    %2483 = vmatprep.subr.bf16.mxu0 %v2420
    %2484 = vmatpush1.bf16.msra.mxu0 %v2419
    %2485 = vmatprep.subr.bf16.mxu0 %v2422
    %2486 = vmatpush1.bf16.msra.mxu0 %v2421
    %2487 = vmatprep.subr.bf16.mxu0 %v2424
    %2488 = vmatpush1.bf16.msra.mxu0 %v2423
    %2489 = vmatprep.subr.bf16.mxu0 %v2426
    %2490 = vmatpush1.bf16.msra.mxu0 %v2425
    %2491 = vmatprep.subr.bf16.mxu0 %v2428
    %2492 = vmatpush1.bf16.msra.mxu0 %v2427
    %2493 = vmatprep.subr.bf16.mxu0 %v2430
    %2494 = vmatpush1.bf16.msra.mxu0 %v2429
    %2495 = vmatprep.subr.bf16.mxu0 %v2432
    %2496 = vmatpush1.bf16.msra.mxu0 %v2431
    %2497 = vmatprep.subr.bf16.mxu0 %v2434
    %2498 = vmatpush1.bf16.msra.mxu0 %v2433
    %2499 = vmatprep.subr.bf16.mxu0 %v2436
    %2500 = vmatpush1.bf16.msra.mxu0 %v2435
    %2501 = vmatprep.subr.bf16.mxu0 %v2438
    %2502 = vmatpush1.bf16.msra.mxu0 %v2437
    %2503 = vmatprep.subr.bf16.mxu0 %v2440
    %2504 = vmatpush1.bf16.msra.mxu0 %v2439
    %2505 = vmatprep.subr.bf16.mxu0 %v2442
    %2506 = vmatpush1.bf16.msra.mxu0 %v2441
    %2507 = vmatprep.subr.bf16.mxu0 %v2444
    %2508 = vmatpush1.bf16.msra.mxu0 %v2443
    %2509 = vmatprep.mubr.bf16.mxu0 %v2270
    %2510 = vmatmul.mubr.bf16.gmra.mrb[0].mxu0 %v2269
    %v2511 = vpop.f32.mrb[0].mxu0
    %v2512 = vadd.f32 %v2310, %v2511
    %v2513 = vpop.f32.mrb[0].mxu0
    %v2514 = vadd.f32 %v2314, %v2513
    %v2515 = vpop.f32.mrb[0].mxu0
    %v2516 = vpop.f32.mrb[0].mxu0
    %2517 = vdwg.mxu0
    %vm2518 = vcmp.ge.f32.partialorder %v2512, 0.0
    %vm2519 = vcmp.ge.f32.partialorder %v2514, 0.0
    %v2520 = vmul.f32 %v2512, 0.2
    %v2521 = vmul.f32 %v2514, 0.2
    %v2522 = vsel %vm2518, %v2512, %v2520
    %v2523 = vsel %vm2519, %v2514, %v2521
    %v2524 = vpack.c.bf16 %v2522, %v2522
    %v2525 = vpack.c.bf16 %v2523, %v2523
    %s2526 = scalar_lea.vmem [#allocation10], 1792
    %v2527 = vld [vmem:[%s2526] sm:$0xff]
    %v2528 = vld [vmem:[%s2526 + $0x8] sm:$0xff]
    %v2529 = vld [vmem:[%s2526 + $0x10] sm:$0xff]
    %v2530 = vld [vmem:[%s2526 + $0x18] sm:$0xff]
    %v2531 = vld [vmem:[%s2526 + $0x20] sm:$0xff]
    %v2532 = vld [vmem:[%s2526 + $0x28] sm:$0xff]
    %v2533 = vld [vmem:[%s2526 + $0x30] sm:$0xff]
    %v2534 = vld [vmem:[%s2526 + $0x38] sm:$0xff]
    %v2535 = vld [vmem:[%s2526 + $0x40] sm:$0xff]
    %v2536 = vld [vmem:[%s2526 + $0x48] sm:$0xff]
    %v2537 = vld [vmem:[%s2526 + $0x50] sm:$0xff]
    %v2538 = vld [vmem:[%s2526 + $0x58] sm:$0xff]
    %v2539 = vld [vmem:[%s2526 + $0x60] sm:$0xff]
    %v2540 = vld [vmem:[%s2526 + $0x68] sm:$0xff]
    %v2541 = vld [vmem:[%s2526 + $0x70] sm:$0xff]
    %v2542 = vld [vmem:[%s2526 + $0x78] sm:$0xff]
    %v2543 = vld [vmem:[%s2526 + $0x80] sm:$0xff]
    %v2544 = vld [vmem:[%s2526 + $0x88] sm:$0xff]
    %v2545 = vld [vmem:[%s2526 + $0x90] sm:$0xff]
    %v2546 = vld [vmem:[%s2526 + $0x98] sm:$0xff]
    %v2547 = vld [vmem:[%s2526 + $0xa0] sm:$0xff]
    %v2548 = vld [vmem:[%s2526 + $0xa8] sm:$0xff]
    %v2549 = vld [vmem:[%s2526 + $0xb0] sm:$0xff]
    %v2550 = vld [vmem:[%s2526 + $0xb8] sm:$0xff]
    %v2551 = vld [vmem:[%s2526 + $0xc0] sm:$0xff]
    %v2552 = vld [vmem:[%s2526 + $0xc8] sm:$0xff]
    %v2553 = vld [vmem:[%s2526 + $0xd0] sm:$0xff]
    %v2554 = vld [vmem:[%s2526 + $0xd8] sm:$0xff]
    %v2555 = vld [vmem:[%s2526 + $0xe0] sm:$0xff]
    %v2556 = vld [vmem:[%s2526 + $0xe8] sm:$0xff]
    %v2557 = vld [vmem:[%s2526 + $0xf0] sm:$0xff]
    %v2558 = vld [vmem:[%s2526 + $0xf8] sm:$0xff]
    %s2559 = scalar_lea.vmem %s7, 14
    %v2560 = vld [vmem:[%s2559] sm:$0x3]
    %v2562 = vlaneseq
    %v2563 = vshrl.u32 %v2562, 7
    %v2564 = vsub.s32 0, %v2563
    %v2565 = vrot.slane %v2560, %v2564
    %v2566 = vlaneseq
    %v2567 = vshrl.u32 %v2566, 7
    %v2568 = vsub.s32 1, %v2567
    %v2569 = vrot.slane %v2560, %v2568
    %v2604 = vunpack.c.l.b16 %v2527
    %v2605 = vunpack.c.h.b16 %v2527
    %v2606 = vunpack.c.l.b16 %v2528
    %v2607 = vunpack.c.h.b16 %v2528
    %v2608 = vunpack.c.l.b16 %v2529
    %v2609 = vunpack.c.h.b16 %v2529
    %v2610 = vunpack.c.l.b16 %v2530
    %v2611 = vunpack.c.h.b16 %v2530
    %v2612 = vunpack.c.l.b16 %v2531
    %v2613 = vunpack.c.h.b16 %v2531
    %v2614 = vunpack.c.l.b16 %v2532
    %v2615 = vunpack.c.h.b16 %v2532
    %v2616 = vunpack.c.l.b16 %v2533
    %v2617 = vunpack.c.h.b16 %v2533
    %v2618 = vunpack.c.l.b16 %v2534
    %v2619 = vunpack.c.h.b16 %v2534
    %v2620 = vunpack.c.l.b16 %v2535
    %v2621 = vunpack.c.h.b16 %v2535
    %v2622 = vunpack.c.l.b16 %v2536
    %v2623 = vunpack.c.h.b16 %v2536
    %v2624 = vunpack.c.l.b16 %v2537
    %v2625 = vunpack.c.h.b16 %v2537
    %v2626 = vunpack.c.l.b16 %v2538
    %v2627 = vunpack.c.h.b16 %v2538
    %v2628 = vunpack.c.l.b16 %v2539
    %v2629 = vunpack.c.h.b16 %v2539
    %v2630 = vunpack.c.l.b16 %v2540
    %v2631 = vunpack.c.h.b16 %v2540
    %v2632 = vunpack.c.l.b16 %v2541
    %v2633 = vunpack.c.h.b16 %v2541
    %v2634 = vunpack.c.l.b16 %v2542
    %v2635 = vunpack.c.h.b16 %v2542
    %v2636 = vunpack.c.l.b16 %v2543
    %v2637 = vunpack.c.h.b16 %v2543
    %v2638 = vunpack.c.l.b16 %v2544
    %v2639 = vunpack.c.h.b16 %v2544
    %v2640 = vunpack.c.l.b16 %v2545
    %v2641 = vunpack.c.h.b16 %v2545
    %v2642 = vunpack.c.l.b16 %v2546
    %v2643 = vunpack.c.h.b16 %v2546
    %v2644 = vunpack.c.l.b16 %v2547
    %v2645 = vunpack.c.h.b16 %v2547
    %v2646 = vunpack.c.l.b16 %v2548
    %v2647 = vunpack.c.h.b16 %v2548
    %v2648 = vunpack.c.l.b16 %v2549
    %v2649 = vunpack.c.h.b16 %v2549
    %v2650 = vunpack.c.l.b16 %v2550
    %v2651 = vunpack.c.h.b16 %v2550
    %v2652 = vunpack.c.l.b16 %v2551
    %v2653 = vunpack.c.h.b16 %v2551
    %v2654 = vunpack.c.l.b16 %v2552
    %v2655 = vunpack.c.h.b16 %v2552
    %v2656 = vunpack.c.l.b16 %v2553
    %v2657 = vunpack.c.h.b16 %v2553
    %v2658 = vunpack.c.l.b16 %v2554
    %v2659 = vunpack.c.h.b16 %v2554
    %v2660 = vunpack.c.l.b16 %v2555
    %v2661 = vunpack.c.h.b16 %v2555
    %v2662 = vunpack.c.l.b16 %v2556
    %v2663 = vunpack.c.h.b16 %v2556
    %v2664 = vunpack.c.l.b16 %v2557
    %v2665 = vunpack.c.h.b16 %v2557
    %v2666 = vunpack.c.l.b16 %v2558
    %v2667 = vunpack.c.h.b16 %v2558
    %v2668 = vpack.c.b16 %v2606, %v2604
    %v2669 = vpack.c.b16 %v2607, %v2605
    %v2670 = vpack.c.b16 %v2610, %v2608
    %v2671 = vpack.c.b16 %v2611, %v2609
    %v2672 = vpack.c.b16 %v2614, %v2612
    %v2673 = vpack.c.b16 %v2615, %v2613
    %v2674 = vpack.c.b16 %v2618, %v2616
    %v2675 = vpack.c.b16 %v2619, %v2617
    %v2676 = vpack.c.b16 %v2622, %v2620
    %v2677 = vpack.c.b16 %v2623, %v2621
    %v2678 = vpack.c.b16 %v2626, %v2624
    %v2679 = vpack.c.b16 %v2627, %v2625
    %v2680 = vpack.c.b16 %v2630, %v2628
    %v2681 = vpack.c.b16 %v2631, %v2629
    %v2682 = vpack.c.b16 %v2634, %v2632
    %v2683 = vpack.c.b16 %v2635, %v2633
    %v2684 = vpack.c.b16 %v2638, %v2636
    %v2685 = vpack.c.b16 %v2639, %v2637
    %v2686 = vpack.c.b16 %v2642, %v2640
    %v2687 = vpack.c.b16 %v2643, %v2641
    %v2688 = vpack.c.b16 %v2646, %v2644
    %v2689 = vpack.c.b16 %v2647, %v2645
    %v2690 = vpack.c.b16 %v2650, %v2648
    %v2691 = vpack.c.b16 %v2651, %v2649
    %v2692 = vpack.c.b16 %v2654, %v2652
    %v2693 = vpack.c.b16 %v2655, %v2653
    %v2694 = vpack.c.b16 %v2658, %v2656
    %v2695 = vpack.c.b16 %v2659, %v2657
    %v2696 = vpack.c.b16 %v2662, %v2660
    %v2697 = vpack.c.b16 %v2663, %v2661
    %v2698 = vpack.c.b16 %v2666, %v2664
    %v2699 = vpack.c.b16 %v2667, %v2665
    %2732 = vmatprep.subr.bf16.mxu0 %v2669
    %2733 = vmatpush1.bf16.msra.mxu0 %v2668
    %2734 = vmatprep.subr.bf16.mxu0 %v2671
    %2735 = vmatpush1.bf16.msra.mxu0 %v2670
    %2736 = vmatprep.subr.bf16.mxu0 %v2673
    %2737 = vmatpush1.bf16.msra.mxu0 %v2672
    %2738 = vmatprep.subr.bf16.mxu0 %v2675
    %2739 = vmatpush1.bf16.msra.mxu0 %v2674
    %2740 = vmatprep.subr.bf16.mxu0 %v2677
    %2741 = vmatpush1.bf16.msra.mxu0 %v2676
    %2742 = vmatprep.subr.bf16.mxu0 %v2679
    %2743 = vmatpush1.bf16.msra.mxu0 %v2678
    %2744 = vmatprep.subr.bf16.mxu0 %v2681
    %2745 = vmatpush1.bf16.msra.mxu0 %v2680
    %2746 = vmatprep.subr.bf16.mxu0 %v2683
    %2747 = vmatpush1.bf16.msra.mxu0 %v2682
    %2748 = vmatprep.subr.bf16.mxu0 %v2685
    %2749 = vmatpush1.bf16.msra.mxu0 %v2684
    %2750 = vmatprep.subr.bf16.mxu0 %v2687
    %2751 = vmatpush1.bf16.msra.mxu0 %v2686
    %2752 = vmatprep.subr.bf16.mxu0 %v2689
    %2753 = vmatpush1.bf16.msra.mxu0 %v2688
    %2754 = vmatprep.subr.bf16.mxu0 %v2691
    %2755 = vmatpush1.bf16.msra.mxu0 %v2690
    %2756 = vmatprep.subr.bf16.mxu0 %v2693
    %2757 = vmatpush1.bf16.msra.mxu0 %v2692
    %2758 = vmatprep.subr.bf16.mxu0 %v2695
    %2759 = vmatpush1.bf16.msra.mxu0 %v2694
    %2760 = vmatprep.subr.bf16.mxu0 %v2697
    %2761 = vmatpush1.bf16.msra.mxu0 %v2696
    %2762 = vmatprep.subr.bf16.mxu0 %v2699
    %2763 = vmatpush1.bf16.msra.mxu0 %v2698
    %2764 = vmatprep.mubr.bf16.mxu0 %v2525
    %2765 = vmatmul.mubr.bf16.gmra.mrb[0].mxu0 %v2524
    %v2766 = vpop.f32.mrb[0].mxu0
    %v2767 = vadd.f32 %v2565, %v2766
    %v2768 = vpop.f32.mrb[0].mxu0
    %v2769 = vadd.f32 %v2569, %v2768
    %v2770 = vpop.f32.mrb[0].mxu0
    %v2771 = vpop.f32.mrb[0].mxu0
    %2772 = vdwg.mxu0
    %vm2773 = vcmp.ge.f32.partialorder %v2767, 0.0
    %vm2774 = vcmp.ge.f32.partialorder %v2769, 0.0
    %v2775 = vmul.f32 %v2767, 0.2
    %v2776 = vmul.f32 %v2769, 0.2
    %v2777 = vsel %vm2773, %v2767, %v2775
    %v2778 = vsel %vm2774, %v2769, %v2776
    %v2781 = vcombine.low %v2777, %v2778
    %2783 = vst [vmem:[#allocation11] sm:$0xff] %v2781
    // Predicated region
    $region54: #{tpu_custom_call.1} parent=1 // pred_check
      _
    $region55: #{tpu_custom_call.1} parent=1 // pred_check_branch
      %2785 = sbr.rel (0) target = $region57
    $region56: #{tpu_custom_call.1} parent=1 // pred_region
      %s2787 = ssub.s32 128, 128
      %2788 = vsyncadd [#allocation4], %s2787
      %s2790 = sshll.u32 [#allocation11], 4
      %s2791 = int_to_ptr.vmem [resolvable:$true] %s2790
      %2793 = dma.vmem_to_hbm [thread:$0]  %s2791, 128, %s8, [#allocation4]
    $region57: #{tpu_custom_call.1} parent=1 // pred_fallthru
      _
    // Predicated region
    $region58: #{tpu_custom_call.1} parent=1 // pred_check
      _
    $region59: #{tpu_custom_call.1} parent=1 // pred_check_branch
      %2795 = sbr.rel (0) target = $region61
    $region60: #{tpu_custom_call.1} parent=1 // pred_region
      %2796 = dma.done [#allocation4], 128
    $region61: #{tpu_custom_call.1} parent=1 // pred_fallthru
      _
    %2797 = vsyncpa [#allocation3], 1
    %2798 = vsyncpa [#allocation6], 1
    %2799 = vsyncpa [#allocation9], 1
    %2800 = vsyncpa [#allocation4], 1

</llo_original>
